<compile_context>
chip_gen: v7x
topology: tpu7x:2x2x1
jax: 0.10.0
libtpu: 0.0.40
codegen_flags: <defaults>
</compile_context>

<pallas_src>
import jax
import jax.numpy as jnp
from jax.experimental import pallas as pl
from jax.experimental.pallas import tpu as pltpu

# ---- problem sizes (small, consistent with the module's __init__) -------------------------
B = 8             # batch
LATENT_DIM = 8    # latent_dim
LSTM_HIDDEN = 32  # lstm_hidden_size
PRE_DIM = 32      # width of encoder_base output (preprocessed latent)
T = 8             # number of path steps the autoregressive encoder samples
DEC_HIDDEN = 32   # decoder_base hidden width
X0 = 0.0          # self.x0 -> value filling start_first_cell
XF = 1.0          # self.xf (stored by the module; unused by this forward skeleton)

_VMEM = pl.BlockSpec(memory_space=pltpu.MemorySpace.VMEM)


# ---- single fused kernel: encoder_base -> autoregressive LSTM sampler -> decoder ----------
def _vae_fwd_kernel(z_ref, eps_ref,
                    enc_w1_ref, enc_b1_ref, enc_w2_ref, enc_b2_ref,
                    w_x_ref, w_pre_ref, w_hh_ref, b_ref,
                    w_head_ref, b_head_ref,
                    dec_w1_ref, dec_b1_ref, dec_w2_ref, dec_b2_ref,
                    mus_ref, logsig_ref, path_ref, zout_ref):
    H = LSTM_HIDDEN

    # -- encoder_base: 2-layer tanh MLP, batch-first ------------------------------------
    z = z_ref[...]                                                              # (B, L)
    h1 = jnp.tanh(jnp.dot(z, enc_w1_ref[...],
                          preferred_element_type=jnp.float32) + enc_b1_ref[...])
    pre = jnp.tanh(jnp.dot(h1, enc_w2_ref[...],
                           preferred_element_type=jnp.float32) + enc_b2_ref[...])  # (B, Hpre)

    # -- hoisted, time-invariant pieces of the recurrence --------------------------------
    # gates = x_t @ W_x^T + pre @ W_pre^T + h @ W_hh^T + (b_ih + b_hh)
    pre_gates = jnp.dot(pre, w_pre_ref[...],
                        preferred_element_type=jnp.float32) + b_ref[...]        # (B, 4H)
    w_x_b = jnp.broadcast_to(w_x_ref[...], (B, 4 * H))     # broadcast once, not per step
    w_hh = w_hh_ref[...]                                    # (H, 4H)
    w_head = w_head_ref[...]                                # (H, 2)  fused [w_mu | w_ls]
    b_head = b_head_ref[...]                                # (1, 2)
    eps_all = eps_ref[...]                                  # (B, T)

    # zero_state for (h, c); start_first_cell = full((B, 1), x0)
    h = jnp.zeros((B, H), jnp.float32)
    c = jnp.zeros((B, H), jnp.float32)
    x_t = jnp.full((B, 1), X0, jnp.float32)

    mu_cols, ls_cols, x_cols = [], [], []
    for t in range(T):                                      # statically unrolled (T = 8)
        gates = x_t * w_x_b + jnp.dot(h, w_hh, preferred_element_type=jnp.float32) + pre_gates
        i_g = jax.nn.sigmoid(gates[:, 0 * H:1 * H])
        f_g = jax.nn.sigmoid(gates[:, 1 * H:2 * H])
        g_g = jnp.tanh(gates[:, 2 * H:3 * H])
        o_g = jax.nn.sigmoid(gates[:, 3 * H:4 * H])
        c = f_g * c + i_g * g_g
        h = o_g * jnp.tanh(c)

        # fused distribution heads: one (B,H)@(H,2) matmul instead of two (B,H)@(H,1)
        head = jnp.dot(h, w_head, preferred_element_type=jnp.float32) + b_head  # (B, 2)
        mu = head[:, 0:1]
        ls = head[:, 1:2]

        # reparametrization trick
        x_t = mu + jnp.exp(ls) * eps_all[:, t:t + 1]

        mu_cols.append(mu)
        ls_cols.append(ls)
        x_cols.append(x_t)

    mus = jnp.concatenate(mu_cols, axis=1)                  # (B, T)
    logsig = jnp.concatenate(ls_cols, axis=1)               # (B, T)
    path = jnp.concatenate(x_cols, axis=1)                  # (B, T)

    # -- decoder_base (tanh MLP) + decoder_means (linear) --------------------------------
    hd = jnp.tanh(jnp.dot(path, dec_w1_ref[...],
                          preferred_element_type=jnp.float32) + dec_b1_ref[...])
    z_out = jnp.dot(hd, dec_w2_ref[...],
                    preferred_element_type=jnp.float32) + dec_b2_ref[...]        # (B, L)

    # bulk stores: one per output
    mus_ref[...] = mus
    logsig_ref[...] = logsig
    path_ref[...] = path
    zout_ref[...] = z_out


# ---- full forward (== VAE_Base_LSTM.forward) ------------------------------------------------
def vae_forward(z, eps, p):
    mus, log_sigmas, path, z_out = pl.pallas_call(
        _vae_fwd_kernel,
        out_shape=(
            jax.ShapeDtypeStruct((B, T), jnp.float32),
            jax.ShapeDtypeStruct((B, T), jnp.float32),
            jax.ShapeDtypeStruct((B, T), jnp.float32),
            jax.ShapeDtypeStruct((B, LATENT_DIM), jnp.float32),
        ),
        in_specs=[_VMEM] * 16,
        out_specs=(_VMEM, _VMEM, _VMEM, _VMEM),
    )(z, eps,
      p["enc_w1"], p["enc_b1"], p["enc_w2"], p["enc_b2"],
      p["w_x"], p["w_pre_t"], p["w_hh_t"], p["b"],
      p["w_head_t"], p["b_head"],
      p["dec_w1"], p["dec_b1"], p["dec_w2"], p["dec_b2"])
    return (mus, log_sigmas), path, z_out


# ---- deterministic parameter init (weights stored pre-transposed / input-major) ------------
def init_params(key):
    ks = jax.random.split(key, 12)
    H, L, Hp, Hd = LSTM_HIDDEN, LATENT_DIM, PRE_DIM, DEC_HIDDEN
    n = lambda k, s: (0.1 * jax.random.normal(k, s)).astype(jnp.float32)
    return {
        # encoder_base
        "enc_w1": n(ks[0], (L, Hp)), "enc_b1": n(ks[1], (1, Hp)),
        "enc_w2": n(ks[2], (Hp, Hp)), "enc_b2": n(ks[3], (1, Hp)),
        # encoder_sample: LSTMCell on concat([x_t, pre]); W_ih split column-wise into the
        # x part (w_x) and the preprocessed-latent part (w_pre), stored input-major so the
        # kernel does batch-first matmuls with no transposes.
        "w_x":     n(ks[4], (1, 4 * H)),     # == W_ih[:, :1].T
        "w_pre_t": n(ks[5], (Hp, 4 * H)),    # == W_ih[:, 1:].T
        "w_hh_t":  n(ks[6], (H, 4 * H)),     # == W_hh.T
        "b":       n(ks[7], (1, 4 * H)),     # bias_ih + bias_hh folded together
        # fused distribution heads: column 0 = mu head, column 1 = log_sigma head
        "w_head_t": jnp.concatenate([n(ks[8], (H, 1)), n(ks[9], (H, 1))], axis=1),
        "b_head":   jnp.array([[0.0, -1.0]], jnp.float32),
        # decoder_base + decoder_means
        "dec_w1": n(ks[10], (T, Hd)), "dec_b1": jnp.zeros((1, Hd), jnp.float32),
        "dec_w2": n(ks[11], (Hd, L)), "dec_b2": jnp.zeros((1, L), jnp.float32),
    }


if __name__ == "__main__":
    key = jax.random.PRNGKey(0)
    kz, keps = jax.random.split(key)
    z = jax.random.normal(kz, (B, LATENT_DIM), dtype=jnp.float32)
    # reparametrization noise, precomputed (batch-first) so the kernel stays deterministic.
    # TODO(synk): could instead draw noise in-kernel with pltpu.prng_seed/prng_random_bits
    #             and pass only a scalar seed, removing this input entirely.
    eps = jax.random.normal(keps, (B, T), dtype=jnp.float32)
    params = init_params(jax.random.PRNGKey(42))

    fwd = jax.jit(vae_forward)
    (mus, log_sigmas), path, z_out = fwd(z, eps, params)
    jax.block_until_ready((mus, log_sigmas, path, z_out))

    assert mus.shape == (B, T) and log_sigmas.shape == (B, T)
    assert path.shape == (B, T)
    assert z_out.shape == (B, LATENT_DIM)
    assert all(jnp.isfinite(a).all() for a in (mus, log_sigmas, path, z_out))
    print("KERNEL_OK")
</pallas_src>

<mosaic_0001>
module attributes {stable_mosaic.version = 11 : i64} {
  func.func @_vae_fwd_kernel(%arg0: memref<8x8xf32, #tpu.memory_space<vmem>>, %arg1: memref<8x8xf32, #tpu.memory_space<vmem>>, %arg2: memref<8x32xf32, #tpu.memory_space<vmem>>, %arg3: memref<1x32xf32, #tpu.memory_space<vmem>>, %arg4: memref<32x32xf32, #tpu.memory_space<vmem>>, %arg5: memref<1x32xf32, #tpu.memory_space<vmem>>, %arg6: memref<1x128xf32, #tpu.memory_space<vmem>>, %arg7: memref<32x128xf32, #tpu.memory_space<vmem>>, %arg8: memref<32x128xf32, #tpu.memory_space<vmem>>, %arg9: memref<1x128xf32, #tpu.memory_space<vmem>>, %arg10: memref<32x2xf32, #tpu.memory_space<vmem>>, %arg11: memref<1x2xf32, #tpu.memory_space<vmem>>, %arg12: memref<8x32xf32, #tpu.memory_space<vmem>>, %arg13: memref<1x32xf32, #tpu.memory_space<vmem>>, %arg14: memref<32x8xf32, #tpu.memory_space<vmem>>, %arg15: memref<1x8xf32, #tpu.memory_space<vmem>>, %arg16: memref<8x8xf32, #tpu.memory_space<vmem>>, %arg17: memref<8x8xf32, #tpu.memory_space<vmem>>, %arg18: memref<8x8xf32, #tpu.memory_space<vmem>>, %arg19: memref<8x8xf32, #tpu.memory_space<vmem>>) attributes {dimension_semantics = [], scalar_prefetch = 0 : i64, scratch_operands = 0 : i64, tpu.core_type = #tpu.core_type<tc>} {
    %c0 = arith.constant 0 : index
    %c0_0 = arith.constant 0 : index
    %0 = vector.load %arg0[%c0, %c0_0] : memref<8x8xf32, #tpu.memory_space<vmem>>, vector<8x8xf32>
    %c0_1 = arith.constant 0 : index
    %c0_2 = arith.constant 0 : index
    %1 = vector.load %arg2[%c0_1, %c0_2] : memref<8x32xf32, #tpu.memory_space<vmem>>, vector<8x32xf32>
    %cst = arith.constant dense<0.000000e+00> : vector<8x32xf32>
    %2 = tpu.matmul %0, %1, %cst {dimension_numbers = #tpu.dot_dimension_numbers<[1], [0], [0], [1], [0, 0, 1, 1], [], []>} : vector<8x8xf32>, vector<8x32xf32>, vector<8x32xf32> -> vector<8x32xf32>
    %c0_3 = arith.constant 0 : index
    %c0_4 = arith.constant 0 : index
    %3 = vector.load %arg3[%c0_3, %c0_4] : memref<1x32xf32, #tpu.memory_space<vmem>>, vector<1x32xf32>
    %4 = vector.broadcast %3 : vector<1x32xf32> to vector<8x32xf32>
    %5 = arith.addf %2, %4 : vector<8x32xf32>
    %6 = math.tanh %5 : vector<8x32xf32>
    %c0_5 = arith.constant 0 : index
    %c0_6 = arith.constant 0 : index
    %7 = vector.load %arg4[%c0_5, %c0_6] : memref<32x32xf32, #tpu.memory_space<vmem>>, vector<32x32xf32>
    %cst_7 = arith.constant dense<0.000000e+00> : vector<8x32xf32>
    %8 = tpu.matmul %6, %7, %cst_7 {dimension_numbers = #tpu.dot_dimension_numbers<[1], [0], [0], [1], [0, 0, 1, 1], [], []>} : vector<8x32xf32>, vector<32x32xf32>, vector<8x32xf32> -> vector<8x32xf32>
    %c0_8 = arith.constant 0 : index
    %c0_9 = arith.constant 0 : index
    %9 = vector.load %arg5[%c0_8, %c0_9] : memref<1x32xf32, #tpu.memory_space<vmem>>, vector<1x32xf32>
    %10 = vector.broadcast %9 : vector<1x32xf32> to vector<8x32xf32>
    %11 = arith.addf %8, %10 : vector<8x32xf32>
    %12 = math.tanh %11 : vector<8x32xf32>
    %c0_10 = arith.constant 0 : index
    %c0_11 = arith.constant 0 : index
    %13 = vector.load %arg7[%c0_10, %c0_11] : memref<32x128xf32, #tpu.memory_space<vmem>>, vector<32x128xf32>
    %cst_12 = arith.constant dense<0.000000e+00> : vector<8x128xf32>
    %14 = tpu.matmul %12, %13, %cst_12 {dimension_numbers = #tpu.dot_dimension_numbers<[1], [0], [0], [1], [0, 0, 1, 1], [], []>} : vector<8x32xf32>, vector<32x128xf32>, vector<8x128xf32> -> vector<8x128xf32>
    %c0_13 = arith.constant 0 : index
    %c0_14 = arith.constant 0 : index
    %15 = vector.load %arg9[%c0_13, %c0_14] : memref<1x128xf32, #tpu.memory_space<vmem>>, vector<1x128xf32>
    %16 = vector.broadcast %15 : vector<1x128xf32> to vector<8x128xf32>
    %17 = arith.addf %14, %16 : vector<8x128xf32>
    %c0_15 = arith.constant 0 : index
    %c0_16 = arith.constant 0 : index
    %18 = vector.load %arg6[%c0_15, %c0_16] : memref<1x128xf32, #tpu.memory_space<vmem>>, vector<1x128xf32>
    %19 = vector.shape_cast %18 : vector<1x128xf32> to vector<1x128xf32>
    %20 = vector.broadcast %19 : vector<1x128xf32> to vector<8x128xf32>
    %c0_17 = arith.constant 0 : index
    %c0_18 = arith.constant 0 : index
    %21 = vector.load %arg8[%c0_17, %c0_18] : memref<32x128xf32, #tpu.memory_space<vmem>>, vector<32x128xf32>
    %c0_19 = arith.constant 0 : index
    %c0_20 = arith.constant 0 : index
    %22 = vector.load %arg10[%c0_19, %c0_20] : memref<32x2xf32, #tpu.memory_space<vmem>>, vector<32x2xf32>
    %c0_21 = arith.constant 0 : index
    %c0_22 = arith.constant 0 : index
    %23 = vector.load %arg11[%c0_21, %c0_22] : memref<1x2xf32, #tpu.memory_space<vmem>>, vector<1x2xf32>
    %c0_23 = arith.constant 0 : index
    %c0_24 = arith.constant 0 : index
    %24 = vector.load %arg1[%c0_23, %c0_24] : memref<8x8xf32, #tpu.memory_space<vmem>>, vector<8x8xf32>
    %cst_25 = arith.constant 0.000000e+00 : f32
    %25 = vector.broadcast %cst_25 : f32 to vector<8x32xf32>
    %cst_26 = arith.constant 0.000000e+00 : f32
    %26 = vector.broadcast %cst_26 : f32 to vector<8x32xf32>
    %cst_27 = arith.constant 0.000000e+00 : f32
    %27 = vector.broadcast %cst_27 : f32 to vector<8x1xf32>
    %28 = vector.broadcast %27 : vector<8x1xf32> to vector<8x128xf32>
    %29 = arith.mulf %28, %20 : vector<8x128xf32>
    %cst_28 = arith.constant dense<0.000000e+00> : vector<8x128xf32>
    %30 = tpu.matmul %25, %21, %cst_28 {dimension_numbers = #tpu.dot_dimension_numbers<[1], [0], [0], [1], [0, 0, 1, 1], [], []>} : vector<8x32xf32>, vector<32x128xf32>, vector<8x128xf32> -> vector<8x128xf32>
    %31 = arith.addf %29, %30 : vector<8x128xf32>
    %32 = arith.addf %31, %17 : vector<8x128xf32>
    %33 = vector.extract_strided_slice %32 {offsets = [0, 0], sizes = [8, 32], strides = [1, 1]} : vector<8x128xf32> to vector<8x32xf32>
    %34 = arith.negf %33 : vector<8x32xf32>
    %35 = math.exp %34 : vector<8x32xf32>
    %cst_29 = arith.constant 1.000000e+00 : f32
    %36 = vector.broadcast %cst_29 : f32 to vector<8x32xf32>
    %37 = arith.addf %36, %35 : vector<8x32xf32>
    %38 = arith.divf %36, %37 : vector<8x32xf32>
    %39 = vector.extract_strided_slice %32 {offsets = [0, 32], sizes = [8, 32], strides = [1, 1]} : vector<8x128xf32> to vector<8x32xf32>
    %40 = arith.negf %39 : vector<8x32xf32>
    %41 = math.exp %40 : vector<8x32xf32>
    %cst_30 = arith.constant 1.000000e+00 : f32
    %42 = vector.broadcast %cst_30 : f32 to vector<8x32xf32>
    %43 = arith.addf %42, %41 : vector<8x32xf32>
    %44 = arith.divf %42, %43 : vector<8x32xf32>
    %45 = vector.extract_strided_slice %32 {offsets = [0, 64], sizes = [8, 32], strides = [1, 1]} : vector<8x128xf32> to vector<8x32xf32>
    %46 = math.tanh %45 : vector<8x32xf32>
    %47 = vector.extract_strided_slice %32 {offsets = [0, 96], sizes = [8, 32], strides = [1, 1]} : vector<8x128xf32> to vector<8x32xf32>
    %48 = arith.negf %47 : vector<8x32xf32>
    %49 = math.exp %48 : vector<8x32xf32>
    %cst_31 = arith.constant 1.000000e+00 : f32
    %50 = vector.broadcast %cst_31 : f32 to vector<8x32xf32>
    %51 = arith.addf %50, %49 : vector<8x32xf32>
    %52 = arith.divf %50, %51 : vector<8x32xf32>
    %53 = arith.mulf %44, %26 : vector<8x32xf32>
    %54 = arith.mulf %38, %46 : vector<8x32xf32>
    %55 = arith.addf %53, %54 : vector<8x32xf32>
    %56 = math.tanh %55 : vector<8x32xf32>
    %57 = arith.mulf %52, %56 : vector<8x32xf32>
    %cst_32 = arith.constant dense<0.000000e+00> : vector<8x2xf32>
    %58 = tpu.matmul %57, %22, %cst_32 {dimension_numbers = #tpu.dot_dimension_numbers<[1], [0], [0], [1], [0, 0, 1, 1], [], []>} : vector<8x32xf32>, vector<32x2xf32>, vector<8x2xf32> -> vector<8x2xf32>
    %59 = vector.broadcast %23 : vector<1x2xf32> to vector<8x2xf32>
    %60 = arith.addf %58, %59 : vector<8x2xf32>
    %61 = vector.extract_strided_slice %60 {offsets = [0, 0], sizes = [8, 1], strides = [1, 1]} : vector<8x2xf32> to vector<8x1xf32>
    %62 = vector.extract_strided_slice %60 {offsets = [0, 1], sizes = [8, 1], strides = [1, 1]} : vector<8x2xf32> to vector<8x1xf32>
    %63 = math.exp %62 : vector<8x1xf32>
    %64 = vector.extract_strided_slice %24 {offsets = [0, 0], sizes = [8, 1], strides = [1, 1]} : vector<8x8xf32> to vector<8x1xf32>
    %65 = arith.mulf %63, %64 : vector<8x1xf32>
    %66 = arith.addf %61, %65 : vector<8x1xf32>
    %67 = vector.broadcast %66 : vector<8x1xf32> to vector<8x128xf32>
    %68 = arith.mulf %67, %20 : vector<8x128xf32>
    %cst_33 = arith.constant dense<0.000000e+00> : vector<8x128xf32>
    %69 = tpu.matmul %57, %21, %cst_33 {dimension_numbers = #tpu.dot_dimension_numbers<[1], [0], [0], [1], [0, 0, 1, 1], [], []>} : vector<8x32xf32>, vector<32x128xf32>, vector<8x128xf32> -> vector<8x128xf32>
    %70 = arith.addf %68, %69 : vector<8x128xf32>
    %71 = arith.addf %70, %17 : vector<8x128xf32>
    %72 = vector.extract_strided_slice %71 {offsets = [0, 0], sizes = [8, 32], strides = [1, 1]} : vector<8x128xf32> to vector<8x32xf32>
    %73 = arith.negf %72 : vector<8x32xf32>
    %74 = math.exp %73 : vector<8x32xf32>
    %cst_34 = arith.constant 1.000000e+00 : f32
    %75 = vector.broadcast %cst_34 : f32 to vector<8x32xf32>
    %76 = arith.addf %75, %74 : vector<8x32xf32>
    %77 = arith.divf %75, %76 : vector<8x32xf32>
    %78 = vector.extract_strided_slice %71 {offsets = [0, 32], sizes = [8, 32], strides = [1, 1]} : vector<8x128xf32> to vector<8x32xf32>
    %79 = arith.negf %78 : vector<8x32xf32>
    %80 = math.exp %79 : vector<8x32xf32>
    %cst_35 = arith.constant 1.000000e+00 : f32
    %81 = vector.broadcast %cst_35 : f32 to vector<8x32xf32>
    %82 = arith.addf %81, %80 : vector<8x32xf32>
    %83 = arith.divf %81, %82 : vector<8x32xf32>
    %84 = vector.extract_strided_slice %71 {offsets = [0, 64], sizes = [8, 32], strides = [1, 1]} : vector<8x128xf32> to vector<8x32xf32>
    %85 = math.tanh %84 : vector<8x32xf32>
    %86 = vector.extract_strided_slice %71 {offsets = [0, 96], sizes = [8, 32], strides = [1, 1]} : vector<8x128xf32> to vector<8x32xf32>
    %87 = arith.negf %86 : vector<8x32xf32>
    %88 = math.exp %87 : vector<8x32xf32>
    %cst_36 = arith.constant 1.000000e+00 : f32
    %89 = vector.broadcast %cst_36 : f32 to vector<8x32xf32>
    %90 = arith.addf %89, %88 : vector<8x32xf32>
    %91 = arith.divf %89, %90 : vector<8x32xf32>
    %92 = arith.mulf %83, %55 : vector<8x32xf32>
    %93 = arith.mulf %77, %85 : vector<8x32xf32>
    %94 = arith.addf %92, %93 : vector<8x32xf32>
    %95 = math.tanh %94 : vector<8x32xf32>
    %96 = arith.mulf %91, %95 : vector<8x32xf32>
    %cst_37 = arith.constant dense<0.000000e+00> : vector<8x2xf32>
    %97 = tpu.matmul %96, %22, %cst_37 {dimension_numbers = #tpu.dot_dimension_numbers<[1], [0], [0], [1], [0, 0, 1, 1], [], []>} : vector<8x32xf32>, vector<32x2xf32>, vector<8x2xf32> -> vector<8x2xf32>
    %98 = vector.broadcast %23 : vector<1x2xf32> to vector<8x2xf32>
    %99 = arith.addf %97, %98 : vector<8x2xf32>
    %100 = vector.extract_strided_slice %99 {offsets = [0, 0], sizes = [8, 1], strides = [1, 1]} : vector<8x2xf32> to vector<8x1xf32>
    %101 = vector.extract_strided_slice %99 {offsets = [0, 1], sizes = [8, 1], strides = [1, 1]} : vector<8x2xf32> to vector<8x1xf32>
    %102 = math.exp %101 : vector<8x1xf32>
    %103 = vector.extract_strided_slice %24 {offsets = [0, 1], sizes = [8, 1], strides = [1, 1]} : vector<8x8xf32> to vector<8x1xf32>
    %104 = arith.mulf %102, %103 : vector<8x1xf32>
    %105 = arith.addf %100, %104 : vector<8x1xf32>
    %106 = vector.broadcast %105 : vector<8x1xf32> to vector<8x128xf32>
    %107 = arith.mulf %106, %20 : vector<8x128xf32>
    %cst_38 = arith.constant dense<0.000000e+00> : vector<8x128xf32>
    %108 = tpu.matmul %96, %21, %cst_38 {dimension_numbers = #tpu.dot_dimension_numbers<[1], [0], [0], [1], [0, 0, 1, 1], [], []>} : vector<8x32xf32>, vector<32x128xf32>, vector<8x128xf32> -> vector<8x128xf32>
    %109 = arith.addf %107, %108 : vector<8x128xf32>
    %110 = arith.addf %109, %17 : vector<8x128xf32>
    %111 = vector.extract_strided_slice %110 {offsets = [0, 0], sizes = [8, 32], strides = [1, 1]} : vector<8x128xf32> to vector<8x32xf32>
    %112 = arith.negf %111 : vector<8x32xf32>
    %113 = math.exp %112 : vector<8x32xf32>
    %cst_39 = arith.constant 1.000000e+00 : f32
    %114 = vector.broadcast %cst_39 : f32 to vector<8x32xf32>
    %115 = arith.addf %114, %113 : vector<8x32xf32>
    %116 = arith.divf %114, %115 : vector<8x32xf32>
    %117 = vector.extract_strided_slice %110 {offsets = [0, 32], sizes = [8, 32], strides = [1, 1]} : vector<8x128xf32> to vector<8x32xf32>
    %118 = arith.negf %117 : vector<8x32xf32>
    %119 = math.exp %118 : vector<8x32xf32>
    %cst_40 = arith.constant 1.000000e+00 : f32
    %120 = vector.broadcast %cst_40 : f32 to vector<8x32xf32>
    %121 = arith.addf %120, %119 : vector<8x32xf32>
    %122 = arith.divf %120, %121 : vector<8x32xf32>
    %123 = vector.extract_strided_slice %110 {offsets = [0, 64], sizes = [8, 32], strides = [1, 1]} : vector<8x128xf32> to vector<8x32xf32>
    %124 = math.tanh %123 : vector<8x32xf32>
    %125 = vector.extract_strided_slice %110 {offsets = [0, 96], sizes = [8, 32], strides = [1, 1]} : vector<8x128xf32> to vector<8x32xf32>
    %126 = arith.negf %125 : vector<8x32xf32>
    %127 = math.exp %126 : vector<8x32xf32>
    %cst_41 = arith.constant 1.000000e+00 : f32
    %128 = vector.broadcast %cst_41 : f32 to vector<8x32xf32>
    %129 = arith.addf %128, %127 : vector<8x32xf32>
    %130 = arith.divf %128, %129 : vector<8x32xf32>
    %131 = arith.mulf %122, %94 : vector<8x32xf32>
    %132 = arith.mulf %116, %124 : vector<8x32xf32>
    %133 = arith.addf %131, %132 : vector<8x32xf32>
    %134 = math.tanh %133 : vector<8x32xf32>
    %135 = arith.mulf %130, %134 : vector<8x32xf32>
    %cst_42 = arith.constant dense<0.000000e+00> : vector<8x2xf32>
    %136 = tpu.matmul %135, %22, %cst_42 {dimension_numbers = #tpu.dot_dimension_numbers<[1], [0], [0], [1], [0, 0, 1, 1], [], []>} : vector<8x32xf32>, vector<32x2xf32>, vector<8x2xf32> -> vector<8x2xf32>
    %137 = vector.broadcast %23 : vector<1x2xf32> to vector<8x2xf32>
    %138 = arith.addf %136, %137 : vector<8x2xf32>
    %139 = vector.extract_strided_slice %138 {offsets = [0, 0], sizes = [8, 1], strides = [1, 1]} : vector<8x2xf32> to vector<8x1xf32>
    %140 = vector.extract_strided_slice %138 {offsets = [0, 1], sizes = [8, 1], strides = [1, 1]} : vector<8x2xf32> to vector<8x1xf32>
    %141 = math.exp %140 : vector<8x1xf32>
    %142 = vector.extract_strided_slice %24 {offsets = [0, 2], sizes = [8, 1], strides = [1, 1]} : vector<8x8xf32> to vector<8x1xf32>
    %143 = arith.mulf %141, %142 : vector<8x1xf32>
    %144 = arith.addf %139, %143 : vector<8x1xf32>
    %145 = vector.broadcast %144 : vector<8x1xf32> to vector<8x128xf32>
    %146 = arith.mulf %145, %20 : vector<8x128xf32>
    %cst_43 = arith.constant dense<0.000000e+00> : vector<8x128xf32>
    %147 = tpu.matmul %135, %21, %cst_43 {dimension_numbers = #tpu.dot_dimension_numbers<[1], [0], [0], [1], [0, 0, 1, 1], [], []>} : vector<8x32xf32>, vector<32x128xf32>, vector<8x128xf32> -> vector<8x128xf32>
    %148 = arith.addf %146, %147 : vector<8x128xf32>
    %149 = arith.addf %148, %17 : vector<8x128xf32>
    %150 = vector.extract_strided_slice %149 {offsets = [0, 0], sizes = [8, 32], strides = [1, 1]} : vector<8x128xf32> to vector<8x32xf32>
    %151 = arith.negf %150 : vector<8x32xf32>
    %152 = math.exp %151 : vector<8x32xf32>
    %cst_44 = arith.constant 1.000000e+00 : f32
    %153 = vector.broadcast %cst_44 : f32 to vector<8x32xf32>
    %154 = arith.addf %153, %152 : vector<8x32xf32>
    %155 = arith.divf %153, %154 : vector<8x32xf32>
    %156 = vector.extract_strided_slice %149 {offsets = [0, 32], sizes = [8, 32], strides = [1, 1]} : vector<8x128xf32> to vector<8x32xf32>
    %157 = arith.negf %156 : vector<8x32xf32>
    %158 = math.exp %157 : vector<8x32xf32>
    %cst_45 = arith.constant 1.000000e+00 : f32
    %159 = vector.broadcast %cst_45 : f32 to vector<8x32xf32>
    %160 = arith.addf %159, %158 : vector<8x32xf32>
    %161 = arith.divf %159, %160 : vector<8x32xf32>
    %162 = vector.extract_strided_slice %149 {offsets = [0, 64], sizes = [8, 32], strides = [1, 1]} : vector<8x128xf32> to vector<8x32xf32>
    %163 = math.tanh %162 : vector<8x32xf32>
    %164 = vector.extract_strided_slice %149 {offsets = [0, 96], sizes = [8, 32], strides = [1, 1]} : vector<8x128xf32> to vector<8x32xf32>
    %165 = arith.negf %164 : vector<8x32xf32>
    %166 = math.exp %165 : vector<8x32xf32>
    %cst_46 = arith.constant 1.000000e+00 : f32
    %167 = vector.broadcast %cst_46 : f32 to vector<8x32xf32>
    %168 = arith.addf %167, %166 : vector<8x32xf32>
    %169 = arith.divf %167, %168 : vector<8x32xf32>
    %170 = arith.mulf %161, %133 : vector<8x32xf32>
    %171 = arith.mulf %155, %163 : vector<8x32xf32>
    %172 = arith.addf %170, %171 : vector<8x32xf32>
    %173 = math.tanh %172 : vector<8x32xf32>
    %174 = arith.mulf %169, %173 : vector<8x32xf32>
    %cst_47 = arith.constant dense<0.000000e+00> : vector<8x2xf32>
    %175 = tpu.matmul %174, %22, %cst_47 {dimension_numbers = #tpu.dot_dimension_numbers<[1], [0], [0], [1], [0, 0, 1, 1], [], []>} : vector<8x32xf32>, vector<32x2xf32>, vector<8x2xf32> -> vector<8x2xf32>
    %176 = vector.broadcast %23 : vector<1x2xf32> to vector<8x2xf32>
    %177 = arith.addf %175, %176 : vector<8x2xf32>
    %178 = vector.extract_strided_slice %177 {offsets = [0, 0], sizes = [8, 1], strides = [1, 1]} : vector<8x2xf32> to vector<8x1xf32>
    %179 = vector.extract_strided_slice %177 {offsets = [0, 1], sizes = [8, 1], strides = [1, 1]} : vector<8x2xf32> to vector<8x1xf32>
    %180 = math.exp %179 : vector<8x1xf32>
    %181 = vector.extract_strided_slice %24 {offsets = [0, 3], sizes = [8, 1], strides = [1, 1]} : vector<8x8xf32> to vector<8x1xf32>
    %182 = arith.mulf %180, %181 : vector<8x1xf32>
    %183 = arith.addf %178, %182 : vector<8x1xf32>
    %184 = vector.broadcast %183 : vector<8x1xf32> to vector<8x128xf32>
    %185 = arith.mulf %184, %20 : vector<8x128xf32>
    %cst_48 = arith.constant dense<0.000000e+00> : vector<8x128xf32>
    %186 = tpu.matmul %174, %21, %cst_48 {dimension_numbers = #tpu.dot_dimension_numbers<[1], [0], [0], [1], [0, 0, 1, 1], [], []>} : vector<8x32xf32>, vector<32x128xf32>, vector<8x128xf32> -> vector<8x128xf32>
    %187 = arith.addf %185, %186 : vector<8x128xf32>
    %188 = arith.addf %187, %17 : vector<8x128xf32>
    %189 = vector.extract_strided_slice %188 {offsets = [0, 0], sizes = [8, 32], strides = [1, 1]} : vector<8x128xf32> to vector<8x32xf32>
    %190 = arith.negf %189 : vector<8x32xf32>
    %191 = math.exp %190 : vector<8x32xf32>
    %cst_49 = arith.constant 1.000000e+00 : f32
    %192 = vector.broadcast %cst_49 : f32 to vector<8x32xf32>
    %193 = arith.addf %192, %191 : vector<8x32xf32>
    %194 = arith.divf %192, %193 : vector<8x32xf32>
    %195 = vector.extract_strided_slice %188 {offsets = [0, 32], sizes = [8, 32], strides = [1, 1]} : vector<8x128xf32> to vector<8x32xf32>
    %196 = arith.negf %195 : vector<8x32xf32>
    %197 = math.exp %196 : vector<8x32xf32>
    %cst_50 = arith.constant 1.000000e+00 : f32
    %198 = vector.broadcast %cst_50 : f32 to vector<8x32xf32>
    %199 = arith.addf %198, %197 : vector<8x32xf32>
    %200 = arith.divf %198, %199 : vector<8x32xf32>
    %201 = vector.extract_strided_slice %188 {offsets = [0, 64], sizes = [8, 32], strides = [1, 1]} : vector<8x128xf32> to vector<8x32xf32>
    %202 = math.tanh %201 : vector<8x32xf32>
    %203 = vector.extract_strided_slice %188 {offsets = [0, 96], sizes = [8, 32], strides = [1, 1]} : vector<8x128xf32> to vector<8x32xf32>
    %204 = arith.negf %203 : vector<8x32xf32>
    %205 = math.exp %204 : vector<8x32xf32>
    %cst_51 = arith.constant 1.000000e+00 : f32
    %206 = vector.broadcast %cst_51 : f32 to vector<8x32xf32>
    %207 = arith.addf %206, %205 : vector<8x32xf32>
    %208 = arith.divf %206, %207 : vector<8x32xf32>
    %209 = arith.mulf %200, %172 : vector<8x32xf32>
    %210 = arith.mulf %194, %202 : vector<8x32xf32>
    %211 = arith.addf %209, %210 : vector<8x32xf32>
    %212 = math.tanh %211 : vector<8x32xf32>
    %213 = arith.mulf %208, %212 : vector<8x32xf32>
    %cst_52 = arith.constant dense<0.000000e+00> : vector<8x2xf32>
    %214 = tpu.matmul %213, %22, %cst_52 {dimension_numbers = #tpu.dot_dimension_numbers<[1], [0], [0], [1], [0, 0, 1, 1], [], []>} : vector<8x32xf32>, vector<32x2xf32>, vector<8x2xf32> -> vector<8x2xf32>
    %215 = vector.broadcast %23 : vector<1x2xf32> to vector<8x2xf32>
    %216 = arith.addf %214, %215 : vector<8x2xf32>
    %217 = vector.extract_strided_slice %216 {offsets = [0, 0], sizes = [8, 1], strides = [1, 1]} : vector<8x2xf32> to vector<8x1xf32>
    %218 = vector.extract_strided_slice %216 {offsets = [0, 1], sizes = [8, 1], strides = [1, 1]} : vector<8x2xf32> to vector<8x1xf32>
    %219 = math.exp %218 : vector<8x1xf32>
    %220 = vector.extract_strided_slice %24 {offsets = [0, 4], sizes = [8, 1], strides = [1, 1]} : vector<8x8xf32> to vector<8x1xf32>
    %221 = arith.mulf %219, %220 : vector<8x1xf32>
    %222 = arith.addf %217, %221 : vector<8x1xf32>
    %223 = vector.broadcast %222 : vector<8x1xf32> to vector<8x128xf32>
    %224 = arith.mulf %223, %20 : vector<8x128xf32>
    %cst_53 = arith.constant dense<0.000000e+00> : vector<8x128xf32>
    %225 = tpu.matmul %213, %21, %cst_53 {dimension_numbers = #tpu.dot_dimension_numbers<[1], [0], [0], [1], [0, 0, 1, 1], [], []>} : vector<8x32xf32>, vector<32x128xf32>, vector<8x128xf32> -> vector<8x128xf32>
    %226 = arith.addf %224, %225 : vector<8x128xf32>
    %227 = arith.addf %226, %17 : vector<8x128xf32>
    %228 = vector.extract_strided_slice %227 {offsets = [0, 0], sizes = [8, 32], strides = [1, 1]} : vector<8x128xf32> to vector<8x32xf32>
    %229 = arith.negf %228 : vector<8x32xf32>
    %230 = math.exp %229 : vector<8x32xf32>
    %cst_54 = arith.constant 1.000000e+00 : f32
    %231 = vector.broadcast %cst_54 : f32 to vector<8x32xf32>
    %232 = arith.addf %231, %230 : vector<8x32xf32>
    %233 = arith.divf %231, %232 : vector<8x32xf32>
    %234 = vector.extract_strided_slice %227 {offsets = [0, 32], sizes = [8, 32], strides = [1, 1]} : vector<8x128xf32> to vector<8x32xf32>
    %235 = arith.negf %234 : vector<8x32xf32>
    %236 = math.exp %235 : vector<8x32xf32>
    %cst_55 = arith.constant 1.000000e+00 : f32
    %237 = vector.broadcast %cst_55 : f32 to vector<8x32xf32>
    %238 = arith.addf %237, %236 : vector<8x32xf32>
    %239 = arith.divf %237, %238 : vector<8x32xf32>
    %240 = vector.extract_strided_slice %227 {offsets = [0, 64], sizes = [8, 32], strides = [1, 1]} : vector<8x128xf32> to vector<8x32xf32>
    %241 = math.tanh %240 : vector<8x32xf32>
    %242 = vector.extract_strided_slice %227 {offsets = [0, 96], sizes = [8, 32], strides = [1, 1]} : vector<8x128xf32> to vector<8x32xf32>
    %243 = arith.negf %242 : vector<8x32xf32>
    %244 = math.exp %243 : vector<8x32xf32>
    %cst_56 = arith.constant 1.000000e+00 : f32
    %245 = vector.broadcast %cst_56 : f32 to vector<8x32xf32>
    %246 = arith.addf %245, %244 : vector<8x32xf32>
    %247 = arith.divf %245, %246 : vector<8x32xf32>
    %248 = arith.mulf %239, %211 : vector<8x32xf32>
    %249 = arith.mulf %233, %241 : vector<8x32xf32>
    %250 = arith.addf %248, %249 : vector<8x32xf32>
    %251 = math.tanh %250 : vector<8x32xf32>
    %252 = arith.mulf %247, %251 : vector<8x32xf32>
    %cst_57 = arith.constant dense<0.000000e+00> : vector<8x2xf32>
    %253 = tpu.matmul %252, %22, %cst_57 {dimension_numbers = #tpu.dot_dimension_numbers<[1], [0], [0], [1], [0, 0, 1, 1], [], []>} : vector<8x32xf32>, vector<32x2xf32>, vector<8x2xf32> -> vector<8x2xf32>
    %254 = vector.broadcast %23 : vector<1x2xf32> to vector<8x2xf32>
    %255 = arith.addf %253, %254 : vector<8x2xf32>
    %256 = vector.extract_strided_slice %255 {offsets = [0, 0], sizes = [8, 1], strides = [1, 1]} : vector<8x2xf32> to vector<8x1xf32>
    %257 = vector.extract_strided_slice %255 {offsets = [0, 1], sizes = [8, 1], strides = [1, 1]} : vector<8x2xf32> to vector<8x1xf32>
    %258 = math.exp %257 : vector<8x1xf32>
    %259 = vector.extract_strided_slice %24 {offsets = [0, 5], sizes = [8, 1], strides = [1, 1]} : vector<8x8xf32> to vector<8x1xf32>
    %260 = arith.mulf %258, %259 : vector<8x1xf32>
    %261 = arith.addf %256, %260 : vector<8x1xf32>
    %262 = vector.broadcast %261 : vector<8x1xf32> to vector<8x128xf32>
    %263 = arith.mulf %262, %20 : vector<8x128xf32>
    %cst_58 = arith.constant dense<0.000000e+00> : vector<8x128xf32>
    %264 = tpu.matmul %252, %21, %cst_58 {dimension_numbers = #tpu.dot_dimension_numbers<[1], [0], [0], [1], [0, 0, 1, 1], [], []>} : vector<8x32xf32>, vector<32x128xf32>, vector<8x128xf32> -> vector<8x128xf32>
    %265 = arith.addf %263, %264 : vector<8x128xf32>
    %266 = arith.addf %265, %17 : vector<8x128xf32>
    %267 = vector.extract_strided_slice %266 {offsets = [0, 0], sizes = [8, 32], strides = [1, 1]} : vector<8x128xf32> to vector<8x32xf32>
    %268 = arith.negf %267 : vector<8x32xf32>
    %269 = math.exp %268 : vector<8x32xf32>
    %cst_59 = arith.constant 1.000000e+00 : f32
    %270 = vector.broadcast %cst_59 : f32 to vector<8x32xf32>
    %271 = arith.addf %270, %269 : vector<8x32xf32>
    %272 = arith.divf %270, %271 : vector<8x32xf32>
    %273 = vector.extract_strided_slice %266 {offsets = [0, 32], sizes = [8, 32], strides = [1, 1]} : vector<8x128xf32> to vector<8x32xf32>
    %274 = arith.negf %273 : vector<8x32xf32>
    %275 = math.exp %274 : vector<8x32xf32>
    %cst_60 = arith.constant 1.000000e+00 : f32
    %276 = vector.broadcast %cst_60 : f32 to vector<8x32xf32>
    %277 = arith.addf %276, %275 : vector<8x32xf32>
    %278 = arith.divf %276, %277 : vector<8x32xf32>
    %279 = vector.extract_strided_slice %266 {offsets = [0, 64], sizes = [8, 32], strides = [1, 1]} : vector<8x128xf32> to vector<8x32xf32>
    %280 = math.tanh %279 : vector<8x32xf32>
    %281 = vector.extract_strided_slice %266 {offsets = [0, 96], sizes = [8, 32], strides = [1, 1]} : vector<8x128xf32> to vector<8x32xf32>
    %282 = arith.negf %281 : vector<8x32xf32>
    %283 = math.exp %282 : vector<8x32xf32>
    %cst_61 = arith.constant 1.000000e+00 : f32
    %284 = vector.broadcast %cst_61 : f32 to vector<8x32xf32>
    %285 = arith.addf %284, %283 : vector<8x32xf32>
    %286 = arith.divf %284, %285 : vector<8x32xf32>
    %287 = arith.mulf %278, %250 : vector<8x32xf32>
    %288 = arith.mulf %272, %280 : vector<8x32xf32>
    %289 = arith.addf %287, %288 : vector<8x32xf32>
    %290 = math.tanh %289 : vector<8x32xf32>
    %291 = arith.mulf %286, %290 : vector<8x32xf32>
    %cst_62 = arith.constant dense<0.000000e+00> : vector<8x2xf32>
    %292 = tpu.matmul %291, %22, %cst_62 {dimension_numbers = #tpu.dot_dimension_numbers<[1], [0], [0], [1], [0, 0, 1, 1], [], []>} : vector<8x32xf32>, vector<32x2xf32>, vector<8x2xf32> -> vector<8x2xf32>
    %293 = vector.broadcast %23 : vector<1x2xf32> to vector<8x2xf32>
    %294 = arith.addf %292, %293 : vector<8x2xf32>
    %295 = vector.extract_strided_slice %294 {offsets = [0, 0], sizes = [8, 1], strides = [1, 1]} : vector<8x2xf32> to vector<8x1xf32>
    %296 = vector.extract_strided_slice %294 {offsets = [0, 1], sizes = [8, 1], strides = [1, 1]} : vector<8x2xf32> to vector<8x1xf32>
    %297 = math.exp %296 : vector<8x1xf32>
    %298 = vector.extract_strided_slice %24 {offsets = [0, 6], sizes = [8, 1], strides = [1, 1]} : vector<8x8xf32> to vector<8x1xf32>
    %299 = arith.mulf %297, %298 : vector<8x1xf32>
    %300 = arith.addf %295, %299 : vector<8x1xf32>
    %301 = vector.broadcast %300 : vector<8x1xf32> to vector<8x128xf32>
    %302 = arith.mulf %301, %20 : vector<8x128xf32>
    %cst_63 = arith.constant dense<0.000000e+00> : vector<8x128xf32>
    %303 = tpu.matmul %291, %21, %cst_63 {dimension_numbers = #tpu.dot_dimension_numbers<[1], [0], [0], [1], [0, 0, 1, 1], [], []>} : vector<8x32xf32>, vector<32x128xf32>, vector<8x128xf32> -> vector<8x128xf32>
    %304 = arith.addf %302, %303 : vector<8x128xf32>
    %305 = arith.addf %304, %17 : vector<8x128xf32>
    %306 = vector.extract_strided_slice %305 {offsets = [0, 0], sizes = [8, 32], strides = [1, 1]} : vector<8x128xf32> to vector<8x32xf32>
    %307 = arith.negf %306 : vector<8x32xf32>
    %308 = math.exp %307 : vector<8x32xf32>
    %cst_64 = arith.constant 1.000000e+00 : f32
    %309 = vector.broadcast %cst_64 : f32 to vector<8x32xf32>
    %310 = arith.addf %309, %308 : vector<8x32xf32>
    %311 = arith.divf %309, %310 : vector<8x32xf32>
    %312 = vector.extract_strided_slice %305 {offsets = [0, 32], sizes = [8, 32], strides = [1, 1]} : vector<8x128xf32> to vector<8x32xf32>
    %313 = arith.negf %312 : vector<8x32xf32>
    %314 = math.exp %313 : vector<8x32xf32>
    %cst_65 = arith.constant 1.000000e+00 : f32
    %315 = vector.broadcast %cst_65 : f32 to vector<8x32xf32>
    %316 = arith.addf %315, %314 : vector<8x32xf32>
    %317 = arith.divf %315, %316 : vector<8x32xf32>
    %318 = vector.extract_strided_slice %305 {offsets = [0, 64], sizes = [8, 32], strides = [1, 1]} : vector<8x128xf32> to vector<8x32xf32>
    %319 = math.tanh %318 : vector<8x32xf32>
    %320 = vector.extract_strided_slice %305 {offsets = [0, 96], sizes = [8, 32], strides = [1, 1]} : vector<8x128xf32> to vector<8x32xf32>
    %321 = arith.negf %320 : vector<8x32xf32>
    %322 = math.exp %321 : vector<8x32xf32>
    %cst_66 = arith.constant 1.000000e+00 : f32
    %323 = vector.broadcast %cst_66 : f32 to vector<8x32xf32>
    %324 = arith.addf %323, %322 : vector<8x32xf32>
    %325 = arith.divf %323, %324 : vector<8x32xf32>
    %326 = arith.mulf %317, %289 : vector<8x32xf32>
    %327 = arith.mulf %311, %319 : vector<8x32xf32>
    %328 = arith.addf %326, %327 : vector<8x32xf32>
    %329 = math.tanh %328 : vector<8x32xf32>
    %330 = arith.mulf %325, %329 : vector<8x32xf32>
    %cst_67 = arith.constant dense<0.000000e+00> : vector<8x2xf32>
    %331 = tpu.matmul %330, %22, %cst_67 {dimension_numbers = #tpu.dot_dimension_numbers<[1], [0], [0], [1], [0, 0, 1, 1], [], []>} : vector<8x32xf32>, vector<32x2xf32>, vector<8x2xf32> -> vector<8x2xf32>
    %332 = vector.broadcast %23 : vector<1x2xf32> to vector<8x2xf32>
    %333 = arith.addf %331, %332 : vector<8x2xf32>
    %334 = vector.extract_strided_slice %333 {offsets = [0, 0], sizes = [8, 1], strides = [1, 1]} : vector<8x2xf32> to vector<8x1xf32>
    %335 = vector.extract_strided_slice %333 {offsets = [0, 1], sizes = [8, 1], strides = [1, 1]} : vector<8x2xf32> to vector<8x1xf32>
    %336 = math.exp %335 : vector<8x1xf32>
    %337 = vector.extract_strided_slice %24 {offsets = [0, 7], sizes = [8, 1], strides = [1, 1]} : vector<8x8xf32> to vector<8x1xf32>
    %338 = arith.mulf %336, %337 : vector<8x1xf32>
    %339 = arith.addf %334, %338 : vector<8x1xf32>
    %340 = tpu.concatenate %61, %100, %139, %178, %217, %256, %295, %334 in 1 : vector<8x1xf32>, vector<8x1xf32>, vector<8x1xf32>, vector<8x1xf32>, vector<8x1xf32>, vector<8x1xf32>, vector<8x1xf32>, vector<8x1xf32> -> vector<8x8xf32>
    %341 = tpu.concatenate %62, %101, %140, %179, %218, %257, %296, %335 in 1 : vector<8x1xf32>, vector<8x1xf32>, vector<8x1xf32>, vector<8x1xf32>, vector<8x1xf32>, vector<8x1xf32>, vector<8x1xf32>, vector<8x1xf32> -> vector<8x8xf32>
    %342 = tpu.concatenate %66, %105, %144, %183, %222, %261, %300, %339 in 1 : vector<8x1xf32>, vector<8x1xf32>, vector<8x1xf32>, vector<8x1xf32>, vector<8x1xf32>, vector<8x1xf32>, vector<8x1xf32>, vector<8x1xf32> -> vector<8x8xf32>
    %c0_68 = arith.constant 0 : index
    %c0_69 = arith.constant 0 : index
    %343 = vector.load %arg12[%c0_68, %c0_69] : memref<8x32xf32, #tpu.memory_space<vmem>>, vector<8x32xf32>
    %cst_70 = arith.constant dense<0.000000e+00> : vector<8x32xf32>
    %344 = tpu.matmul %342, %343, %cst_70 {dimension_numbers = #tpu.dot_dimension_numbers<[1], [0], [0], [1], [0, 0, 1, 1], [], []>} : vector<8x8xf32>, vector<8x32xf32>, vector<8x32xf32> -> vector<8x32xf32>
    %c0_71 = arith.constant 0 : index
    %c0_72 = arith.constant 0 : index
    %345 = vector.load %arg13[%c0_71, %c0_72] : memref<1x32xf32, #tpu.memory_space<vmem>>, vector<1x32xf32>
    %346 = vector.broadcast %345 : vector<1x32xf32> to vector<8x32xf32>
    %347 = arith.addf %344, %346 : vector<8x32xf32>
    %348 = math.tanh %347 : vector<8x32xf32>
    %c0_73 = arith.constant 0 : index
    %c0_74 = arith.constant 0 : index
    %349 = vector.load %arg14[%c0_73, %c0_74] : memref<32x8xf32, #tpu.memory_space<vmem>>, vector<32x8xf32>
    %cst_75 = arith.constant dense<0.000000e+00> : vector<8x8xf32>
    %350 = tpu.matmul %348, %349, %cst_75 {dimension_numbers = #tpu.dot_dimension_numbers<[1], [0], [0], [1], [0, 0, 1, 1], [], []>} : vector<8x32xf32>, vector<32x8xf32>, vector<8x8xf32> -> vector<8x8xf32>
    %c0_76 = arith.constant 0 : index
    %c0_77 = arith.constant 0 : index
    %351 = vector.load %arg15[%c0_76, %c0_77] : memref<1x8xf32, #tpu.memory_space<vmem>>, vector<1x8xf32>
    %352 = vector.broadcast %351 : vector<1x8xf32> to vector<8x8xf32>
    %353 = arith.addf %350, %352 : vector<8x8xf32>
    %c0_78 = arith.constant 0 : index
    %c0_79 = arith.constant 0 : index
    %354 = vector.load %arg16[%c0_78, %c0_79] : memref<8x8xf32, #tpu.memory_space<vmem>>, vector<8x8xf32>
    tpu.vector_store %arg16[%c0_78, %c0_79], %340 {strides = array<i32>} : memref<8x8xf32, #tpu.memory_space<vmem>>, vector<8x8xf32>,
    %c0_80 = arith.constant 0 : index
    %c0_81 = arith.constant 0 : index
    %355 = vector.load %arg17[%c0_80, %c0_81] : memref<8x8xf32, #tpu.memory_space<vmem>>, vector<8x8xf32>
    tpu.vector_store %arg17[%c0_80, %c0_81], %341 {strides = array<i32>} : memref<8x8xf32, #tpu.memory_space<vmem>>, vector<8x8xf32>,
    %c0_82 = arith.constant 0 : index
    %c0_83 = arith.constant 0 : index
    %356 = vector.load %arg18[%c0_82, %c0_83] : memref<8x8xf32, #tpu.memory_space<vmem>>, vector<8x8xf32>
    tpu.vector_store %arg18[%c0_82, %c0_83], %342 {strides = array<i32>} : memref<8x8xf32, #tpu.memory_space<vmem>>, vector<8x8xf32>,
    %c0_84 = arith.constant 0 : index
    %c0_85 = arith.constant 0 : index
    %357 = vector.load %arg19[%c0_84, %c0_85] : memref<8x8xf32, #tpu.memory_space<vmem>>, vector<8x8xf32>
    tpu.vector_store %arg19[%c0_84, %c0_85], %353 {strides = array<i32>} : memref<8x8xf32, #tpu.memory_space<vmem>>, vector<8x8xf32>,
    return
  }
}

</mosaic_0001>

<llo_original>
// kernel: vae_forward.1
$region0: #{vae_forward.1}
  #allocation0 [shape = 'u32[]', space=smem, size = 0x4, offset = 0x4, fixed_abs, tag = 'smem constant byte address 0x4 - core index']
  #allocation1 [shape = 'u32[144,128]{1,0:T(1,128)}', space=vmem, size = 0x12000, scoped, tag = 'internal scratch']
  %s0 = inlined_call_operand.hbm [shape: f32[8,8], index: 0, kind: input, shape index: {}]
  %s1 = inlined_call_operand.hbm [shape: f32[8,8], index: 1, kind: input, shape index: {}]
  %s2 = inlined_call_operand.vmem [shape: f32[8,32], index: 2, kind: input, shape index: {}]
  %s3 = inlined_call_operand.hbm [shape: f32[1,32], index: 3, kind: input, shape index: {}]
  %s4 = inlined_call_operand.vmem [shape: f32[32,32], index: 4, kind: input, shape index: {}]
  %s5 = inlined_call_operand.vmem [shape: f32[1,32], index: 5, kind: input, shape index: {}]
  %s6 = inlined_call_operand.vmem [shape: f32[1,128], index: 6, kind: input, shape index: {}]
  %s7 = inlined_call_operand.vmem [shape: f32[32,128], index: 7, kind: input, shape index: {}]
  %s8 = inlined_call_operand.vmem [shape: f32[32,128], index: 8, kind: input, shape index: {}]
  %s9 = inlined_call_operand.hbm [shape: f32[1,128], index: 9, kind: input, shape index: {}]
  %s10 = inlined_call_operand.vmem [shape: f32[32,2], index: 10, kind: input, shape index: {}]
  %s11 = inlined_call_operand.hbm [shape: f32[1,2], index: 11, kind: input, shape index: {}]
  %s12 = inlined_call_operand.hbm [shape: f32[8,32], index: 12, kind: input, shape index: {}]
  %s13 = inlined_call_operand.hbm [shape: f32[1,32], index: 13, kind: input, shape index: {}]
  %s14 = inlined_call_operand.vmem [shape: f32[32,8], index: 14, kind: input, shape index: {}]
  %s15 = inlined_call_operand.hbm [shape: f32[1,8], index: 15, kind: input, shape index: {}]
  %s16 = inlined_call_operand.hbm [shape: f32[8,8], index: 16, kind: output, shape index: {0}]
  %s17 = inlined_call_operand.hbm [shape: f32[8,8], index: 17, kind: output, shape index: {1}]
  %s18 = inlined_call_operand.hbm [shape: f32[8,8], index: 18, kind: output, shape index: {2}]
  %s19 = inlined_call_operand.hbm [shape: f32[8,8], index: 19, kind: output, shape index: {3}]
  %20 = xla_tuple %s16, %s17, %s18, %s19
  %s21 = sld [smem:[#allocation0]]
  $region130: #{vae_forward.1} parent=0
    _
  %s23 = ssub.s32 1, %s21
  %s24 = scalar_select 0, %s23, %s21
  $region1: #{vae_forward.1} parent=0
    #allocation2 [shape = 'u8[4096]{0}', space=vmem, size = 0x1000, scoped, tag = 'input window, operand 0, single buffered']
    #allocation3 [shape = 's32[1]{0}', space=sflag, size = 0x4, scoped, tag = 'scoped memory for vae_forward.1']
    #allocation4 [shape = 's32[1]{0}', space=sflag, size = 0x4, scoped, tag = 'scoped memory for vae_forward.1']
    #allocation5 [shape = 'u8[4096]{0}', space=vmem, size = 0x1000, scoped, tag = 'input window, operand 1, single buffered']
    #allocation6 [shape = 's32[1]{0}', space=sflag, size = 0x4, scoped, tag = 'scoped memory for vae_forward.1']
    #allocation7 [shape = 'u8[512]{0}', space=vmem, size = 0x400, scoped, tag = 'input window, operand 3, single buffered']
    #allocation8 [shape = 'u8[512]{0}', space=vmem, size = 0x400, scoped, tag = 'input window, operand 9, single buffered']
    #allocation9 [shape = 's32[1]{0}', space=sflag, size = 0x4, scoped, tag = 'scoped memory for vae_forward.1']
    #allocation10 [shape = 'u8[512]{0}', space=vmem, size = 0x400, scoped, tag = 'input window, operand 11, single buffered']
    #allocation11 [shape = 'u8[4096]{0}', space=vmem, size = 0x1000, scoped, tag = 'input window, operand 12, single buffered']
    #allocation12 [shape = 's32[1]{0}', space=sflag, size = 0x4, scoped, tag = 'scoped memory for vae_forward.1']
    #allocation13 [shape = 'u8[512]{0}', space=vmem, size = 0x400, scoped, tag = 'input window, operand 13, single buffered']
    #allocation14 [shape = 'u8[512]{0}', space=vmem, size = 0x400, scoped, tag = 'input window, operand 15, single buffered']
    #allocation15 [shape = 's32[1]{0}', space=sflag, size = 0x4, scoped, tag = 'scoped memory for vae_forward.1']
    #allocation16 [shape = 'u8[4096]{0}', space=vmem, size = 0x1000, scoped, tag = 'output window, operand 0, single buffered']
    #allocation17 [shape = 'u8[4096]{0}', space=vmem, size = 0x1000, scoped, tag = 'output window, operand 1, single buffered']
    #allocation18 [shape = 's32[1]{0}', space=sflag, size = 0x4, scoped, tag = 'scoped memory for vae_forward.1']
    #allocation19 [shape = 'u8[4096]{0}', space=vmem, size = 0x1000, scoped, tag = 'output window, operand 2, single buffered']
    #allocation20 [shape = 'u8[4096]{0}', space=vmem, size = 0x1000, scoped, tag = 'output window, operand 3, single buffered']
    #allocation21 [shape = 's32[1]{0}', space=sflag, size = 0x4, scoped, tag = 'scoped memory for vae_forward.1']
    %25 = vsyncpa [#allocation3], 0
    %26 = vsyncpa [#allocation6], 0
    %27 = vsyncpa [#allocation9], 0
    %28 = vsyncpa [#allocation12], 0
    %29 = vsyncpa [#allocation15], 0
    %30 = vsyncpa [#allocation4], 0
    %31 = vsyncpa [#allocation18], 0
    %32 = vsyncpa [#allocation21], 0
    // Predicated region
    $region2: #{vae_forward.1} parent=1 // pred_check
      _
    $region3: #{vae_forward.1} parent=1 // pred_check_branch
      %34 = sbr.rel (0) target = $region5
    $region4: #{vae_forward.1} parent=1 // pred_region
      %s36 = ssub.s32 128, 128
      %37 = vsyncadd [#allocation3], %s36
      %s39 = sshll.u32 [#allocation2], 4
      %s40 = int_to_ptr.vmem [resolvable:$true] %s39
      %42 = dma.hbm_to_vmem [thread:$0]  %s0, 128, %s40, [#allocation3]
    $region5: #{vae_forward.1} parent=1 // pred_fallthru
      _
    // Predicated region
    $region6: #{vae_forward.1} parent=1 // pred_check
      _
    $region7: #{vae_forward.1} parent=1 // pred_check_branch
      %44 = sbr.rel (0) target = $region9
    $region8: #{vae_forward.1} parent=1 // pred_region
      %s46 = ssub.s32 128, 128
      %47 = vsyncadd [#allocation6], %s46
      %s49 = sshll.u32 [#allocation5], 4
      %s50 = int_to_ptr.vmem [resolvable:$true] %s49
      %52 = dma.hbm_to_vmem [thread:$0]  %s1, 128, %s50, [#allocation6]
    $region9: #{vae_forward.1} parent=1 // pred_fallthru
      _
    // Predicated region
    $region10: #{vae_forward.1} parent=1 // pred_check
      _
    $region11: #{vae_forward.1} parent=1 // pred_check_branch
      %54 = sbr.rel (0) target = $region13
    $region12: #{vae_forward.1} parent=1 // pred_region
      _
    $region13: #{vae_forward.1} parent=1 // pred_fallthru
      _
    // Predicated region
    $region14: #{vae_forward.1} parent=1 // pred_check
      _
    $region15: #{vae_forward.1} parent=1 // pred_check_branch
      %56 = sbr.rel (0) target = $region17
    $region16: #{vae_forward.1} parent=1 // pred_region
      %s58 = ssub.s32 16, 16
      %59 = vsyncadd [#allocation6], %s58
      %s61 = sshll.u32 [#allocation7], 4
      %s62 = int_to_ptr.vmem [resolvable:$true] %s61
      %64 = dma.hbm_to_vmem [thread:$0]  %s3, 16, %s62, [#allocation6]
    $region17: #{vae_forward.1} parent=1 // pred_fallthru
      _
    // Predicated region
    $region18: #{vae_forward.1} parent=1 // pred_check
      _
    $region19: #{vae_forward.1} parent=1 // pred_check_branch
      %66 = sbr.rel (0) target = $region21
    $region20: #{vae_forward.1} parent=1 // pred_region
      _
    $region21: #{vae_forward.1} parent=1 // pred_fallthru
      _
    // Predicated region
    $region22: #{vae_forward.1} parent=1 // pred_check
      _
    $region23: #{vae_forward.1} parent=1 // pred_check_branch
      %68 = sbr.rel (0) target = $region25
    $region24: #{vae_forward.1} parent=1 // pred_region
      _
    $region25: #{vae_forward.1} parent=1 // pred_fallthru
      _
    // Predicated region
    $region26: #{vae_forward.1} parent=1 // pred_check
      _
    $region27: #{vae_forward.1} parent=1 // pred_check_branch
      %70 = sbr.rel (0) target = $region29
    $region28: #{vae_forward.1} parent=1 // pred_region
      _
    $region29: #{vae_forward.1} parent=1 // pred_fallthru
      _
    // Predicated region
    $region30: #{vae_forward.1} parent=1 // pred_check
      _
    $region31: #{vae_forward.1} parent=1 // pred_check_branch
      %72 = sbr.rel (0) target = $region33
    $region32: #{vae_forward.1} parent=1 // pred_region
      _
    $region33: #{vae_forward.1} parent=1 // pred_fallthru
      _
    // Predicated region
    $region34: #{vae_forward.1} parent=1 // pred_check
      _
    $region35: #{vae_forward.1} parent=1 // pred_check_branch
      %74 = sbr.rel (0) target = $region37
    $region36: #{vae_forward.1} parent=1 // pred_region
      _
    $region37: #{vae_forward.1} parent=1 // pred_fallthru
      _
    // Predicated region
    $region38: #{vae_forward.1} parent=1 // pred_check
      _
    $region39: #{vae_forward.1} parent=1 // pred_check_branch
      %76 = sbr.rel (0) target = $region41
    $region40: #{vae_forward.1} parent=1 // pred_region
      %s78 = ssub.s32 16, 16
      %79 = vsyncadd [#allocation9], %s78
      %s81 = sshll.u32 [#allocation8], 4
      %s82 = int_to_ptr.vmem [resolvable:$true] %s81
      %84 = dma.hbm_to_vmem [thread:$0]  %s9, 16, %s82, [#allocation9]
    $region41: #{vae_forward.1} parent=1 // pred_fallthru
      _
    // Predicated region
    $region42: #{vae_forward.1} parent=1 // pred_check
      _
    $region43: #{vae_forward.1} parent=1 // pred_check_branch
      %86 = sbr.rel (0) target = $region45
    $region44: #{vae_forward.1} parent=1 // pred_region
      _
    $region45: #{vae_forward.1} parent=1 // pred_fallthru
      _
    // Predicated region
    $region46: #{vae_forward.1} parent=1 // pred_check
      _
    $region47: #{vae_forward.1} parent=1 // pred_check_branch
      %88 = sbr.rel (0) target = $region49
    $region48: #{vae_forward.1} parent=1 // pred_region
      %s90 = ssub.s32 16, 16
      %91 = vsyncadd [#allocation9], %s90
      %s93 = sshll.u32 [#allocation10], 4
      %s94 = int_to_ptr.vmem [resolvable:$true] %s93
      %96 = dma.hbm_to_vmem [thread:$0]  %s11, 16, %s94, [#allocation9]
    $region49: #{vae_forward.1} parent=1 // pred_fallthru
      _
    // Predicated region
    $region50: #{vae_forward.1} parent=1 // pred_check
      _
    $region51: #{vae_forward.1} parent=1 // pred_check_branch
      %98 = sbr.rel (0) target = $region53
    $region52: #{vae_forward.1} parent=1 // pred_region
      %s100 = ssub.s32 128, 128
      %101 = vsyncadd [#allocation12], %s100
      %s103 = sshll.u32 [#allocation11], 4
      %s104 = int_to_ptr.vmem [resolvable:$true] %s103
      %106 = dma.hbm_to_vmem [thread:$0]  %s12, 128, %s104, [#allocation12]
    $region53: #{vae_forward.1} parent=1 // pred_fallthru
      _
    // Predicated region
    $region54: #{vae_forward.1} parent=1 // pred_check
      _
    $region55: #{vae_forward.1} parent=1 // pred_check_branch
      %108 = sbr.rel (0) target = $region57
    $region56: #{vae_forward.1} parent=1 // pred_region
      %s110 = ssub.s32 16, 16
      %111 = vsyncadd [#allocation12], %s110
      %s113 = sshll.u32 [#allocation13], 4
      %s114 = int_to_ptr.vmem [resolvable:$true] %s113
      %116 = dma.hbm_to_vmem [thread:$0]  %s13, 16, %s114, [#allocation12]
    $region57: #{vae_forward.1} parent=1 // pred_fallthru
      _
    // Predicated region
    $region58: #{vae_forward.1} parent=1 // pred_check
      _
    $region59: #{vae_forward.1} parent=1 // pred_check_branch
      %118 = sbr.rel (0) target = $region61
    $region60: #{vae_forward.1} parent=1 // pred_region
      _
    $region61: #{vae_forward.1} parent=1 // pred_fallthru
      _
    // Predicated region
    $region62: #{vae_forward.1} parent=1 // pred_check
      _
    $region63: #{vae_forward.1} parent=1 // pred_check_branch
      %120 = sbr.rel (0) target = $region65
    $region64: #{vae_forward.1} parent=1 // pred_region
      %s122 = ssub.s32 16, 16
      %123 = vsyncadd [#allocation15], %s122
      %s125 = sshll.u32 [#allocation14], 4
      %s126 = int_to_ptr.vmem [resolvable:$true] %s125
      %128 = dma.hbm_to_vmem [thread:$0]  %s15, 16, %s126, [#allocation15]
    $region65: #{vae_forward.1} parent=1 // pred_fallthru
      _
    // Predicated region
    $region66: #{vae_forward.1} parent=1 // pred_check
      _
    $region67: #{vae_forward.1} parent=1 // pred_check_branch
      %130 = sbr.rel (0) target = $region69
    $region68: #{vae_forward.1} parent=1 // pred_region
      %131 = dma.done [#allocation3], 128
    $region69: #{vae_forward.1} parent=1 // pred_fallthru
      _
    // Predicated region
    $region70: #{vae_forward.1} parent=1 // pred_check
      _
    $region71: #{vae_forward.1} parent=1 // pred_check_branch
      %133 = sbr.rel (0) target = $region73
    $region72: #{vae_forward.1} parent=1 // pred_region
      %134 = dma.done [#allocation6], 128
    $region73: #{vae_forward.1} parent=1 // pred_fallthru
      _
    // Predicated region
    $region74: #{vae_forward.1} parent=1 // pred_check
      _
    $region75: #{vae_forward.1} parent=1 // pred_check_branch
      %136 = sbr.rel (0) target = $region77
    $region76: #{vae_forward.1} parent=1 // pred_region
      %137 = dma.done [#allocation6], 16
    $region77: #{vae_forward.1} parent=1 // pred_fallthru
      _
    // Predicated region
    $region78: #{vae_forward.1} parent=1 // pred_check
      _
    $region79: #{vae_forward.1} parent=1 // pred_check_branch
      %139 = sbr.rel (0) target = $region81
    $region80: #{vae_forward.1} parent=1 // pred_region
      %140 = dma.done [#allocation9], 16
    $region81: #{vae_forward.1} parent=1 // pred_fallthru
      _
    // Predicated region
    $region82: #{vae_forward.1} parent=1 // pred_check
      _
    $region83: #{vae_forward.1} parent=1 // pred_check_branch
      %142 = sbr.rel (0) target = $region85
    $region84: #{vae_forward.1} parent=1 // pred_region
      %143 = dma.done [#allocation9], 16
    $region85: #{vae_forward.1} parent=1 // pred_fallthru
      _
    // Predicated region
    $region86: #{vae_forward.1} parent=1 // pred_check
      _
    $region87: #{vae_forward.1} parent=1 // pred_check_branch
      %145 = sbr.rel (0) target = $region89
    $region88: #{vae_forward.1} parent=1 // pred_region
      %146 = dma.done [#allocation12], 128
    $region89: #{vae_forward.1} parent=1 // pred_fallthru
      _
    // Predicated region
    $region90: #{vae_forward.1} parent=1 // pred_check
      _
    $region91: #{vae_forward.1} parent=1 // pred_check_branch
      %148 = sbr.rel (0) target = $region93
    $region92: #{vae_forward.1} parent=1 // pred_region
      %149 = dma.done [#allocation12], 16
    $region93: #{vae_forward.1} parent=1 // pred_fallthru
      _
    // Predicated region
    $region94: #{vae_forward.1} parent=1 // pred_check
      _
    $region95: #{vae_forward.1} parent=1 // pred_check_branch
      %151 = sbr.rel (0) target = $region97
    $region96: #{vae_forward.1} parent=1 // pred_region
      %152 = dma.done [#allocation15], 16
    $region97: #{vae_forward.1} parent=1 // pred_fallthru
      _
    %v153 = vld [vmem:[#allocation2] sm:$0xff]
    %v154 = vld [vmem:[%s2] sm:$0xff]
    %v155 = vld [vmem:[#allocation7] sm:$0x1]
    %v157 = vlaneseq
    %v158 = vshrl.u32 %v157, 7
    %v159 = vsub.s32 0, %v158
    %v160 = vrot.slane %v155, %v159
    %vm162 = vcmask 64512
    %v164 = vsel %vm162, %v153, 0
    %166 = vmatprep.subr.mxu0 0.0
    %167 = vmatpush1.msra.mxu0 %v154
    %168 = vmatprep.subr.mxu0 0.0
    %169 = vmatpush1.msra.mxu0 0.0
    %170 = vmatprep.subr.mxu0 0.0
    %171 = vmatpush1.msra.mxu0 0.0
    %172 = vmatprep.subr.mxu0 0.0
    %173 = vmatpush1.msra.mxu0 0.0
    %174 = vmatprep.subr.mxu0 0.0
    %175 = vmatpush1.msra.mxu0 0.0
    %176 = vmatprep.subr.mxu0 0.0
    %177 = vmatpush1.msra.mxu0 0.0
    %178 = vmatprep.subr.mxu0 0.0
    %179 = vmatpush1.msra.mxu0 0.0
    %180 = vmatprep.subr.mxu0 0.0
    %181 = vmatpush1.msra.mxu0 0.0
    %182 = vmatprep.subr.mxu0 0.0
    %183 = vmatpush1.msra.mxu0 0.0
    %184 = vmatprep.subr.mxu0 0.0
    %185 = vmatpush1.msra.mxu0 0.0
    %186 = vmatprep.subr.mxu0 0.0
    %187 = vmatpush1.msra.mxu0 0.0
    %188 = vmatprep.subr.mxu0 0.0
    %189 = vmatpush1.msra.mxu0 0.0
    %190 = vmatprep.subr.mxu0 0.0
    %191 = vmatpush1.msra.mxu0 0.0
    %192 = vmatprep.subr.mxu0 0.0
    %193 = vmatpush1.msra.mxu0 0.0
    %194 = vmatprep.subr.mxu0 0.0
    %195 = vmatpush1.msra.mxu0 0.0
    %196 = vmatprep.subr.mxu0 0.0
    %197 = vmatpush1.msra.mxu0 0.0
    %198 = vmatprep.subr.mxu0 0.0
    %199 = vmatpush1.msra.mxu0 0.0
    %200 = vmatprep.subr.mxu0 0.0
    %201 = vmatpush1.msra.mxu0 0.0
    %202 = vmatprep.subr.mxu0 0.0
    %203 = vmatpush1.msra.mxu0 0.0
    %204 = vmatprep.subr.mxu0 0.0
    %205 = vmatpush1.msra.mxu0 0.0
    %206 = vmatprep.subr.mxu0 0.0
    %207 = vmatpush1.msra.mxu0 0.0
    %208 = vmatprep.subr.mxu0 0.0
    %209 = vmatpush1.msra.mxu0 0.0
    %210 = vmatprep.subr.mxu0 0.0
    %211 = vmatpush1.msra.mxu0 0.0
    %212 = vmatprep.subr.mxu0 0.0
    %213 = vmatpush1.msra.mxu0 0.0
    %214 = vmatprep.subr.mxu0 0.0
    %215 = vmatpush1.msra.mxu0 0.0
    %216 = vmatprep.subr.mxu0 0.0
    %217 = vmatpush1.msra.mxu0 0.0
    %218 = vmatprep.subr.mxu0 0.0
    %219 = vmatpush1.msra.mxu0 0.0
    %220 = vmatprep.subr.mxu0 0.0
    %221 = vmatpush1.msra.mxu0 0.0
    %222 = vmatprep.subr.mxu0 0.0
    %223 = vmatpush1.msra.mxu0 0.0
    %224 = vmatprep.subr.mxu0 0.0
    %225 = vmatpush1.msra.mxu0 0.0
    %226 = vmatprep.subr.mxu0 0.0
    %227 = vmatpush1.msra.mxu0 0.0
    %228 = vmatprep.subr.mxu0 0.0
    %229 = vmatpush1.msra.mxu0 0.0
    %230 = vmatprep.mubr.f32.mxu0 0.0
    %231 = vmatmul.mubr.f32.gmra.mrb[0].mxu0 %v164
    %v232 = vpop.f32.mrb[0].mxu0
    %v233 = vadd.f32 %v160, %v232
    %v234 = vpop.f32.mrb[0].mxu0
    %235 = vdwg.mxu0
    %v236 = vtanh.pop %v233
    %v237 = vld [vmem:[%s4] sm:$0xff]
    %v238 = vld [vmem:[%s4 + $0x8] sm:$0xff]
    %v239 = vld [vmem:[%s4 + $0x10] sm:$0xff]
    %v240 = vld [vmem:[%s4 + $0x18] sm:$0xff]
    %v241 = vld [vmem:[%s5] sm:$0x1]
    %v243 = vlaneseq
    %v244 = vshrl.u32 %v243, 7
    %v245 = vsub.s32 0, %v244
    %v246 = vrot.slane %v241, %v245
    %vm248 = vcmask 261120
    %v250 = vsel %vm248, %v236, 0
    %252 = vmatprep.subr.mxu0 0.0
    %253 = vmatpush1.msra.mxu0 %v237
    %254 = vmatprep.subr.mxu0 0.0
    %255 = vmatpush1.msra.mxu0 %v238
    %256 = vmatprep.subr.mxu0 0.0
    %257 = vmatpush1.msra.mxu0 %v239
    %258 = vmatprep.subr.mxu0 0.0
    %259 = vmatpush1.msra.mxu0 %v240
    %260 = vmatprep.subr.mxu0 0.0
    %261 = vmatpush1.msra.mxu0 0.0
    %262 = vmatprep.subr.mxu0 0.0
    %263 = vmatpush1.msra.mxu0 0.0
    %264 = vmatprep.subr.mxu0 0.0
    %265 = vmatpush1.msra.mxu0 0.0
    %266 = vmatprep.subr.mxu0 0.0
    %267 = vmatpush1.msra.mxu0 0.0
    %268 = vmatprep.subr.mxu0 0.0
    %269 = vmatpush1.msra.mxu0 0.0
    %270 = vmatprep.subr.mxu0 0.0
    %271 = vmatpush1.msra.mxu0 0.0
    %272 = vmatprep.subr.mxu0 0.0
    %273 = vmatpush1.msra.mxu0 0.0
    %274 = vmatprep.subr.mxu0 0.0
    %275 = vmatpush1.msra.mxu0 0.0
    %276 = vmatprep.subr.mxu0 0.0
    %277 = vmatpush1.msra.mxu0 0.0
    %278 = vmatprep.subr.mxu0 0.0
    %279 = vmatpush1.msra.mxu0 0.0
    %280 = vmatprep.subr.mxu0 0.0
    %281 = vmatpush1.msra.mxu0 0.0
    %282 = vmatprep.subr.mxu0 0.0
    %283 = vmatpush1.msra.mxu0 0.0
    %284 = vmatprep.subr.mxu0 0.0
    %285 = vmatpush1.msra.mxu0 0.0
    %286 = vmatprep.subr.mxu0 0.0
    %287 = vmatpush1.msra.mxu0 0.0
    %288 = vmatprep.subr.mxu0 0.0
    %289 = vmatpush1.msra.mxu0 0.0
    %290 = vmatprep.subr.mxu0 0.0
    %291 = vmatpush1.msra.mxu0 0.0
    %292 = vmatprep.subr.mxu0 0.0
    %293 = vmatpush1.msra.mxu0 0.0
    %294 = vmatprep.subr.mxu0 0.0
    %295 = vmatpush1.msra.mxu0 0.0
    %296 = vmatprep.subr.mxu0 0.0
    %297 = vmatpush1.msra.mxu0 0.0
    %298 = vmatprep.subr.mxu0 0.0
    %299 = vmatpush1.msra.mxu0 0.0
    %300 = vmatprep.subr.mxu0 0.0
    %301 = vmatpush1.msra.mxu0 0.0
    %302 = vmatprep.subr.mxu0 0.0
    %303 = vmatpush1.msra.mxu0 0.0
    %304 = vmatprep.subr.mxu0 0.0
    %305 = vmatpush1.msra.mxu0 0.0
    %306 = vmatprep.subr.mxu0 0.0
    %307 = vmatpush1.msra.mxu0 0.0
    %308 = vmatprep.subr.mxu0 0.0
    %309 = vmatpush1.msra.mxu0 0.0
    %310 = vmatprep.subr.mxu0 0.0
    %311 = vmatpush1.msra.mxu0 0.0
    %312 = vmatprep.subr.mxu0 0.0
    %313 = vmatpush1.msra.mxu0 0.0
    %314 = vmatprep.subr.mxu0 0.0
    %315 = vmatpush1.msra.mxu0 0.0
    %316 = vmatprep.mubr.f32.mxu0 0.0
    %317 = vmatmul.mubr.f32.gmra.mrb[0].mxu0 %v250
    %v318 = vpop.f32.mrb[0].mxu0
    %v319 = vadd.f32 %v246, %v318
    %v320 = vpop.f32.mrb[0].mxu0
    %321 = vdwg.mxu0
    %v322 = vtanh.pop %v319
    %v323 = vld [vmem:[%s7] sm:$0xff]
    %v324 = vld [vmem:[%s7 + $0x8] sm:$0xff]
    %v325 = vld [vmem:[%s7 + $0x10] sm:$0xff]
    %v326 = vld [vmem:[%s7 + $0x18] sm:$0xff]
    %v327 = vld [vmem:[#allocation8] sm:$0x1]
    %v329 = vlaneseq
    %v330 = vshrl.u32 %v329, 7
    %v331 = vsub.s32 0, %v330
    %v332 = vrot.slane %v327, %v331
    %v335 = vsel %vm248, %v322, 0
    %337 = vmatprep.subr.mxu0 0.0
    %338 = vmatpush1.msra.mxu0 %v323
    %339 = vmatprep.subr.mxu0 0.0
    %340 = vmatpush1.msra.mxu0 %v324
    %341 = vmatprep.subr.mxu0 0.0
    %342 = vmatpush1.msra.mxu0 %v325
    %343 = vmatprep.subr.mxu0 0.0
    %344 = vmatpush1.msra.mxu0 %v326
    %345 = vmatprep.subr.mxu0 0.0
    %346 = vmatpush1.msra.mxu0 0.0
    %347 = vmatprep.subr.mxu0 0.0
    %348 = vmatpush1.msra.mxu0 0.0
    %349 = vmatprep.subr.mxu0 0.0
    %350 = vmatpush1.msra.mxu0 0.0
    %351 = vmatprep.subr.mxu0 0.0
    %352 = vmatpush1.msra.mxu0 0.0
    %353 = vmatprep.subr.mxu0 0.0
    %354 = vmatpush1.msra.mxu0 0.0
    %355 = vmatprep.subr.mxu0 0.0
    %356 = vmatpush1.msra.mxu0 0.0
    %357 = vmatprep.subr.mxu0 0.0
    %358 = vmatpush1.msra.mxu0 0.0
    %359 = vmatprep.subr.mxu0 0.0
    %360 = vmatpush1.msra.mxu0 0.0
    %361 = vmatprep.subr.mxu0 0.0
    %362 = vmatpush1.msra.mxu0 0.0
    %363 = vmatprep.subr.mxu0 0.0
    %364 = vmatpush1.msra.mxu0 0.0
    %365 = vmatprep.subr.mxu0 0.0
    %366 = vmatpush1.msra.mxu0 0.0
    %367 = vmatprep.subr.mxu0 0.0
    %368 = vmatpush1.msra.mxu0 0.0
    %369 = vmatprep.subr.mxu0 0.0
    %370 = vmatpush1.msra.mxu0 0.0
    %371 = vmatprep.subr.mxu0 0.0
    %372 = vmatpush1.msra.mxu0 0.0
    %373 = vmatprep.subr.mxu0 0.0
    %374 = vmatpush1.msra.mxu0 0.0
    %375 = vmatprep.subr.mxu0 0.0
    %376 = vmatpush1.msra.mxu0 0.0
    %377 = vmatprep.subr.mxu0 0.0
    %378 = vmatpush1.msra.mxu0 0.0
    %379 = vmatprep.subr.mxu0 0.0
    %380 = vmatpush1.msra.mxu0 0.0
    %381 = vmatprep.subr.mxu0 0.0
    %382 = vmatpush1.msra.mxu0 0.0
    %383 = vmatprep.subr.mxu0 0.0
    %384 = vmatpush1.msra.mxu0 0.0
    %385 = vmatprep.subr.mxu0 0.0
    %386 = vmatpush1.msra.mxu0 0.0
    %387 = vmatprep.subr.mxu0 0.0
    %388 = vmatpush1.msra.mxu0 0.0
    %389 = vmatprep.subr.mxu0 0.0
    %390 = vmatpush1.msra.mxu0 0.0
    %391 = vmatprep.subr.mxu0 0.0
    %392 = vmatpush1.msra.mxu0 0.0
    %393 = vmatprep.subr.mxu0 0.0
    %394 = vmatpush1.msra.mxu0 0.0
    %395 = vmatprep.subr.mxu0 0.0
    %396 = vmatpush1.msra.mxu0 0.0
    %397 = vmatprep.subr.mxu0 0.0
    %398 = vmatpush1.msra.mxu0 0.0
    %399 = vmatprep.subr.mxu0 0.0
    %400 = vmatpush1.msra.mxu0 0.0
    %401 = vmatprep.mubr.f32.mxu0 0.0
    %402 = vmatmul.mubr.f32.gmra.mrb[0].mxu0 %v335
    %v403 = vpop.f32.mrb[0].mxu0
    %v404 = vadd.f32 %v332, %v403
    %v405 = vpop.f32.mrb[0].mxu0
    %406 = vdwg.mxu0
    %v407 = vld [vmem:[%s6] sm:$0x1]
    %v409 = vlaneseq
    %v410 = vshrl.u32 %v409, 7
    %v411 = vsub.s32 0, %v410
    %v412 = vrot.slane %v407, %v411
    %v414 = vld [vmem:[%s8] sm:$0xff]
    %v415 = vld [vmem:[%s8 + $0x8] sm:$0xff]
    %v416 = vld [vmem:[%s8 + $0x10] sm:$0xff]
    %v417 = vld [vmem:[%s8 + $0x18] sm:$0xff]
    %v418 = vld [vmem:[%s10] sm:$0xff]
    %v419 = vld [vmem:[%s10 + $0x8] sm:$0xff]
    %v420 = vld [vmem:[%s10 + $0x10] sm:$0xff]
    %v421 = vld [vmem:[%s10 + $0x18] sm:$0xff]
    %v422 = vld [vmem:[#allocation10] sm:$0x1]
    %v423 = vld [vmem:[#allocation5] sm:$0xff]
    %v424 = vmul.f32 %v412, 0.0
    %v426 = vsel %vm248, 0.0, 0
    %428 = vmatprep.subr.mxu0 0.0
    %429 = vmatpush1.msra.mxu0 %v414
    %430 = vmatprep.subr.mxu0 0.0
    %431 = vmatpush1.msra.mxu0 %v415
    %432 = vmatprep.subr.mxu0 0.0
    %433 = vmatpush1.msra.mxu0 %v416
    %434 = vmatprep.subr.mxu0 0.0
    %435 = vmatpush1.msra.mxu0 %v417
    %436 = vmatprep.subr.mxu0 0.0
    %437 = vmatpush1.msra.mxu0 0.0
    %438 = vmatprep.subr.mxu0 0.0
    %439 = vmatpush1.msra.mxu0 0.0
    %440 = vmatprep.subr.mxu0 0.0
    %441 = vmatpush1.msra.mxu0 0.0
    %442 = vmatprep.subr.mxu0 0.0
    %443 = vmatpush1.msra.mxu0 0.0
    %444 = vmatprep.subr.mxu0 0.0
    %445 = vmatpush1.msra.mxu0 0.0
    %446 = vmatprep.subr.mxu0 0.0
    %447 = vmatpush1.msra.mxu0 0.0
    %448 = vmatprep.subr.mxu0 0.0
    %449 = vmatpush1.msra.mxu0 0.0
    %450 = vmatprep.subr.mxu0 0.0
    %451 = vmatpush1.msra.mxu0 0.0
    %452 = vmatprep.subr.mxu0 0.0
    %453 = vmatpush1.msra.mxu0 0.0
    %454 = vmatprep.subr.mxu0 0.0
    %455 = vmatpush1.msra.mxu0 0.0
    %456 = vmatprep.subr.mxu0 0.0
    %457 = vmatpush1.msra.mxu0 0.0
    %458 = vmatprep.subr.mxu0 0.0
    %459 = vmatpush1.msra.mxu0 0.0
    %460 = vmatprep.subr.mxu0 0.0
    %461 = vmatpush1.msra.mxu0 0.0
    %462 = vmatprep.subr.mxu0 0.0
    %463 = vmatpush1.msra.mxu0 0.0
    %464 = vmatprep.subr.mxu0 0.0
    %465 = vmatpush1.msra.mxu0 0.0
    %466 = vmatprep.subr.mxu0 0.0
    %467 = vmatpush1.msra.mxu0 0.0
    %468 = vmatprep.subr.mxu0 0.0
    %469 = vmatpush1.msra.mxu0 0.0
    %470 = vmatprep.subr.mxu0 0.0
    %471 = vmatpush1.msra.mxu0 0.0
    %472 = vmatprep.subr.mxu0 0.0
    %473 = vmatpush1.msra.mxu0 0.0
    %474 = vmatprep.subr.mxu0 0.0
    %475 = vmatpush1.msra.mxu0 0.0
    %476 = vmatprep.subr.mxu0 0.0
    %477 = vmatpush1.msra.mxu0 0.0
    %478 = vmatprep.subr.mxu0 0.0
    %479 = vmatpush1.msra.mxu0 0.0
    %480 = vmatprep.subr.mxu0 0.0
    %481 = vmatpush1.msra.mxu0 0.0
    %482 = vmatprep.subr.mxu0 0.0
    %483 = vmatpush1.msra.mxu0 0.0
    %484 = vmatprep.subr.mxu0 0.0
    %485 = vmatpush1.msra.mxu0 0.0
    %486 = vmatprep.subr.mxu0 0.0
    %487 = vmatpush1.msra.mxu0 0.0
    %488 = vmatprep.subr.mxu0 0.0
    %489 = vmatpush1.msra.mxu0 0.0
    %490 = vmatprep.subr.mxu0 0.0
    %491 = vmatpush1.msra.mxu0 0.0
    %492 = vmatprep.mubr.f32.mxu0 0.0
    %493 = vmatmul.mubr.f32.gmra.mrb[0].mxu0 %v426
    %v494 = vpop.f32.mrb[0].mxu0
    %v495 = vadd.f32 0.0, %v494
    %v496 = vpop.f32.mrb[0].mxu0
    %497 = vdwg.mxu0
    %v498 = vadd.f32 %v424, %v495
    %v499 = vadd.f32 %v498, %v404
    %v500 = vxor.u32 %v499, 2147483648
    %v501 = vmul.f32 %v500, 1.442695
    %v502 = vpow.pop %v501
    %v503 = vadd.f32 %v502, 1.0
    %v504 = vrcp.pop %v503
    %v505 = vmul.f32 1.0, %v504
    %v506 = vtanh.pop %v499
    %v507 = vmul.f32 %v505, 0.0
    %509 = vrot.lane.b32.xlu0 %v506, 64
    %v510 = vpop.permute.xlu0 %509
    %v512 = vmul.f32 %v505, %v510
    %514 = vrot.lane.b32.xlu0 %v512, 32
    %v515 = vpop.permute.xlu0 %514
    %v517 = vadd.f32 %v507, %v515
    %v518 = vtanh.pop %v517
    %520 = vrot.lane.b32.xlu0 %v518, 64
    %v521 = vpop.permute.xlu0 %520
    %v523 = vmul.f32 %v505, %v521
    %v525 = vlaneseq
    %v526 = vshrl.u32 %v525, 7
    %v527 = vsub.s32 0, %v526
    %v528 = vrot.slane %v422, %v527
    %531 = vrot.lane.b32.xlu0 %v523, 32
    %v532 = vpop.permute.xlu0 %531
    %v533 = vsel %vm248, %v532, 0
    %535 = vmatprep.subr.mxu0 0.0
    %536 = vmatpush1.msra.mxu0 %v418
    %537 = vmatprep.subr.mxu0 0.0
    %538 = vmatpush1.msra.mxu0 %v419
    %539 = vmatprep.subr.mxu0 0.0
    %540 = vmatpush1.msra.mxu0 %v420
    %541 = vmatprep.subr.mxu0 0.0
    %542 = vmatpush1.msra.mxu0 %v421
    %543 = vmatprep.subr.mxu0 0.0
    %544 = vmatpush1.msra.mxu0 0.0
    %545 = vmatprep.subr.mxu0 0.0
    %546 = vmatpush1.msra.mxu0 0.0
    %547 = vmatprep.subr.mxu0 0.0
    %548 = vmatpush1.msra.mxu0 0.0
    %549 = vmatprep.subr.mxu0 0.0
    %550 = vmatpush1.msra.mxu0 0.0
    %551 = vmatprep.subr.mxu0 0.0
    %552 = vmatpush1.msra.mxu0 0.0
    %553 = vmatprep.subr.mxu0 0.0
    %554 = vmatpush1.msra.mxu0 0.0
    %555 = vmatprep.subr.mxu0 0.0
    %556 = vmatpush1.msra.mxu0 0.0
    %557 = vmatprep.subr.mxu0 0.0
    %558 = vmatpush1.msra.mxu0 0.0
    %559 = vmatprep.subr.mxu0 0.0
    %560 = vmatpush1.msra.mxu0 0.0
    %561 = vmatprep.subr.mxu0 0.0
    %562 = vmatpush1.msra.mxu0 0.0
    %563 = vmatprep.subr.mxu0 0.0
    %564 = vmatpush1.msra.mxu0 0.0
    %565 = vmatprep.subr.mxu0 0.0
    %566 = vmatpush1.msra.mxu0 0.0
    %567 = vmatprep.subr.mxu0 0.0
    %568 = vmatpush1.msra.mxu0 0.0
    %569 = vmatprep.subr.mxu0 0.0
    %570 = vmatpush1.msra.mxu0 0.0
    %571 = vmatprep.subr.mxu0 0.0
    %572 = vmatpush1.msra.mxu0 0.0
    %573 = vmatprep.subr.mxu0 0.0
    %574 = vmatpush1.msra.mxu0 0.0
    %575 = vmatprep.subr.mxu0 0.0
    %576 = vmatpush1.msra.mxu0 0.0
    %577 = vmatprep.subr.mxu0 0.0
    %578 = vmatpush1.msra.mxu0 0.0
    %579 = vmatprep.subr.mxu0 0.0
    %580 = vmatpush1.msra.mxu0 0.0
    %581 = vmatprep.subr.mxu0 0.0
    %582 = vmatpush1.msra.mxu0 0.0
    %583 = vmatprep.subr.mxu0 0.0
    %584 = vmatpush1.msra.mxu0 0.0
    %585 = vmatprep.subr.mxu0 0.0
    %586 = vmatpush1.msra.mxu0 0.0
    %587 = vmatprep.subr.mxu0 0.0
    %588 = vmatpush1.msra.mxu0 0.0
    %589 = vmatprep.subr.mxu0 0.0
    %590 = vmatpush1.msra.mxu0 0.0
    %591 = vmatprep.subr.mxu0 0.0
    %592 = vmatpush1.msra.mxu0 0.0
    %593 = vmatprep.subr.mxu0 0.0
    %594 = vmatpush1.msra.mxu0 0.0
    %595 = vmatprep.subr.mxu0 0.0
    %596 = vmatpush1.msra.mxu0 0.0
    %597 = vmatprep.subr.mxu0 0.0
    %598 = vmatpush1.msra.mxu0 0.0
    %599 = vmatprep.mubr.f32.mxu0 0.0
    %600 = vmatmul.mubr.f32.gmra.mrb[0].mxu0 %v533
    %v601 = vpop.f32.mrb[0].mxu0
    %v602 = vadd.f32 %v528, %v601
    %v603 = vpop.f32.mrb[0].mxu0
    %604 = vdwg.mxu0
    %v605 = vmul.f32 %v602, 1.442695
    %v606 = vpow.pop %v605
    %608 = vrot.lane.b32.xlu0 %v423, 1
    %v609 = vpop.permute.xlu0 %608
    %v611 = vmul.f32 %v606, %v609
    %613 = vrot.lane.b32.xlu0 %v611, 127
    %v614 = vpop.permute.xlu0 %613
    %v616 = vadd.f32 %v602, %v614
    %618 = vset.pattern.permute.xlu0 0
    %619 = vperm.xlu0 %618, %v616
    %v620 = vpop.permute.xlu0 %619
    %v622 = vmul.f32 %v620, %v412
    %623 = vmatprep.subr.mxu0 0.0
    %624 = vmatpush1.msra.mxu0 %v414
    %625 = vmatprep.subr.mxu0 0.0
    %626 = vmatpush1.msra.mxu0 %v415
    %627 = vmatprep.subr.mxu0 0.0
    %628 = vmatpush1.msra.mxu0 %v416
    %629 = vmatprep.subr.mxu0 0.0
    %630 = vmatpush1.msra.mxu0 %v417
    %631 = vmatprep.subr.mxu0 0.0
    %632 = vmatpush1.msra.mxu0 0.0
    %633 = vmatprep.subr.mxu0 0.0
    %634 = vmatpush1.msra.mxu0 0.0
    %635 = vmatprep.subr.mxu0 0.0
    %636 = vmatpush1.msra.mxu0 0.0
    %637 = vmatprep.subr.mxu0 0.0
    %638 = vmatpush1.msra.mxu0 0.0
    %639 = vmatprep.subr.mxu0 0.0
    %640 = vmatpush1.msra.mxu0 0.0
    %641 = vmatprep.subr.mxu0 0.0
    %642 = vmatpush1.msra.mxu0 0.0
    %643 = vmatprep.subr.mxu0 0.0
    %644 = vmatpush1.msra.mxu0 0.0
    %645 = vmatprep.subr.mxu0 0.0
    %646 = vmatpush1.msra.mxu0 0.0
    %647 = vmatprep.subr.mxu0 0.0
    %648 = vmatpush1.msra.mxu0 0.0
    %649 = vmatprep.subr.mxu0 0.0
    %650 = vmatpush1.msra.mxu0 0.0
    %651 = vmatprep.subr.mxu0 0.0
    %652 = vmatpush1.msra.mxu0 0.0
    %653 = vmatprep.subr.mxu0 0.0
    %654 = vmatpush1.msra.mxu0 0.0
    %655 = vmatprep.subr.mxu0 0.0
    %656 = vmatpush1.msra.mxu0 0.0
    %657 = vmatprep.subr.mxu0 0.0
    %658 = vmatpush1.msra.mxu0 0.0
    %659 = vmatprep.subr.mxu0 0.0
    %660 = vmatpush1.msra.mxu0 0.0
    %661 = vmatprep.subr.mxu0 0.0
    %662 = vmatpush1.msra.mxu0 0.0
    %663 = vmatprep.subr.mxu0 0.0
    %664 = vmatpush1.msra.mxu0 0.0
    %665 = vmatprep.subr.mxu0 0.0
    %666 = vmatpush1.msra.mxu0 0.0
    %667 = vmatprep.subr.mxu0 0.0
    %668 = vmatpush1.msra.mxu0 0.0
    %669 = vmatprep.subr.mxu0 0.0
    %670 = vmatpush1.msra.mxu0 0.0
    %671 = vmatprep.subr.mxu0 0.0
    %672 = vmatpush1.msra.mxu0 0.0
    %673 = vmatprep.subr.mxu0 0.0
    %674 = vmatpush1.msra.mxu0 0.0
    %675 = vmatprep.subr.mxu0 0.0
    %676 = vmatpush1.msra.mxu0 0.0
    %677 = vmatprep.subr.mxu0 0.0
    %678 = vmatpush1.msra.mxu0 0.0
    %679 = vmatprep.subr.mxu0 0.0
    %680 = vmatpush1.msra.mxu0 0.0
    %681 = vmatprep.subr.mxu0 0.0
    %682 = vmatpush1.msra.mxu0 0.0
    %683 = vmatprep.subr.mxu0 0.0
    %684 = vmatpush1.msra.mxu0 0.0
    %685 = vmatprep.subr.mxu0 0.0
    %686 = vmatpush1.msra.mxu0 0.0
    %687 = vmatprep.mubr.f32.mxu0 0.0
    %688 = vmatmul.mubr.f32.gmra.mrb[0].mxu0 %v533
    %v689 = vpop.f32.mrb[0].mxu0
    %v690 = vadd.f32 0.0, %v689
    %v691 = vpop.f32.mrb[0].mxu0
    %692 = vdwg.mxu0
    %v693 = vadd.f32 %v622, %v690
    %v694 = vadd.f32 %v693, %v404
    %v695 = vxor.u32 %v694, 2147483648
    %v696 = vmul.f32 %v695, 1.442695
    %v697 = vpow.pop %v696
    %v698 = vadd.f32 %v697, 1.0
    %v699 = vrcp.pop %v698
    %v700 = vmul.f32 1.0, %v699
    %v701 = vtanh.pop %v694
    %v702 = vmul.f32 %v700, %v517
    %704 = vrot.lane.b32.xlu0 %v701, 64
    %v705 = vpop.permute.xlu0 %704
    %v707 = vmul.f32 %v700, %v705
    %709 = vrot.lane.b32.xlu0 %v707, 32
    %v710 = vpop.permute.xlu0 %709
    %v712 = vadd.f32 %v702, %v710
    %v713 = vtanh.pop %v712
    %715 = vrot.lane.b32.xlu0 %v713, 64
    %v716 = vpop.permute.xlu0 %715
    %v718 = vmul.f32 %v700, %v716
    %720 = vrot.lane.b32.xlu0 %v718, 32
    %v721 = vpop.permute.xlu0 %720
    %v722 = vsel %vm248, %v721, 0
    %724 = vmatprep.subr.mxu0 0.0
    %725 = vmatpush1.msra.mxu0 %v418
    %726 = vmatprep.subr.mxu0 0.0
    %727 = vmatpush1.msra.mxu0 %v419
    %728 = vmatprep.subr.mxu0 0.0
    %729 = vmatpush1.msra.mxu0 %v420
    %730 = vmatprep.subr.mxu0 0.0
    %731 = vmatpush1.msra.mxu0 %v421
    %732 = vmatprep.subr.mxu0 0.0
    %733 = vmatpush1.msra.mxu0 0.0
    %734 = vmatprep.subr.mxu0 0.0
    %735 = vmatpush1.msra.mxu0 0.0
    %736 = vmatprep.subr.mxu0 0.0
    %737 = vmatpush1.msra.mxu0 0.0
    %738 = vmatprep.subr.mxu0 0.0
    %739 = vmatpush1.msra.mxu0 0.0
    %740 = vmatprep.subr.mxu0 0.0
    %741 = vmatpush1.msra.mxu0 0.0
    %742 = vmatprep.subr.mxu0 0.0
    %743 = vmatpush1.msra.mxu0 0.0
    %744 = vmatprep.subr.mxu0 0.0
    %745 = vmatpush1.msra.mxu0 0.0
    %746 = vmatprep.subr.mxu0 0.0
    %747 = vmatpush1.msra.mxu0 0.0
    %748 = vmatprep.subr.mxu0 0.0
    %749 = vmatpush1.msra.mxu0 0.0
    %750 = vmatprep.subr.mxu0 0.0
    %751 = vmatpush1.msra.mxu0 0.0
    %752 = vmatprep.subr.mxu0 0.0
    %753 = vmatpush1.msra.mxu0 0.0
    %754 = vmatprep.subr.mxu0 0.0
    %755 = vmatpush1.msra.mxu0 0.0
    %756 = vmatprep.subr.mxu0 0.0
    %757 = vmatpush1.msra.mxu0 0.0
    %758 = vmatprep.subr.mxu0 0.0
    %759 = vmatpush1.msra.mxu0 0.0
    %760 = vmatprep.subr.mxu0 0.0
    %761 = vmatpush1.msra.mxu0 0.0
    %762 = vmatprep.subr.mxu0 0.0
    %763 = vmatpush1.msra.mxu0 0.0
    %764 = vmatprep.subr.mxu0 0.0
    %765 = vmatpush1.msra.mxu0 0.0
    %766 = vmatprep.subr.mxu0 0.0
    %767 = vmatpush1.msra.mxu0 0.0
    %768 = vmatprep.subr.mxu0 0.0
    %769 = vmatpush1.msra.mxu0 0.0
    %770 = vmatprep.subr.mxu0 0.0
    %771 = vmatpush1.msra.mxu0 0.0
    %772 = vmatprep.subr.mxu0 0.0
    %773 = vmatpush1.msra.mxu0 0.0
    %774 = vmatprep.subr.mxu0 0.0
    %775 = vmatpush1.msra.mxu0 0.0
    %776 = vmatprep.subr.mxu0 0.0
    %777 = vmatpush1.msra.mxu0 0.0
    %778 = vmatprep.subr.mxu0 0.0
    %779 = vmatpush1.msra.mxu0 0.0
    %780 = vmatprep.subr.mxu0 0.0
    %781 = vmatpush1.msra.mxu0 0.0
    %782 = vmatprep.subr.mxu0 0.0
    %783 = vmatpush1.msra.mxu0 0.0
    %784 = vmatprep.subr.mxu0 0.0
    %785 = vmatpush1.msra.mxu0 0.0
    %786 = vmatprep.subr.mxu0 0.0
    %787 = vmatpush1.msra.mxu0 0.0
    %788 = vmatprep.mubr.f32.mxu0 0.0
    %789 = vmatmul.mubr.f32.gmra.mrb[0].mxu0 %v722
    %v790 = vpop.f32.mrb[0].mxu0
    %v791 = vadd.f32 %v528, %v790
    %v792 = vpop.f32.mrb[0].mxu0
    %793 = vdwg.mxu0
    %v794 = vmul.f32 %v791, 1.442695
    %v795 = vpow.pop %v794
    %v796 = vmul.f32 %v795, %v423
    %798 = vrot.lane.b32.xlu0 %v796, 127
    %v799 = vpop.permute.xlu0 %798
    %v801 = vadd.f32 %v791, %v799
    %803 = vset.pattern.permute.xlu0 0
    %804 = vperm.xlu0 %803, %v801
    %v805 = vpop.permute.xlu0 %804
    %v807 = vmul.f32 %v805, %v412
    %808 = vmatprep.subr.mxu0 0.0
    %809 = vmatpush1.msra.mxu0 %v414
    %810 = vmatprep.subr.mxu0 0.0
    %811 = vmatpush1.msra.mxu0 %v415
    %812 = vmatprep.subr.mxu0 0.0
    %813 = vmatpush1.msra.mxu0 %v416
    %814 = vmatprep.subr.mxu0 0.0
    %815 = vmatpush1.msra.mxu0 %v417
    %816 = vmatprep.subr.mxu0 0.0
    %817 = vmatpush1.msra.mxu0 0.0
    %818 = vmatprep.subr.mxu0 0.0
    %819 = vmatpush1.msra.mxu0 0.0
    %820 = vmatprep.subr.mxu0 0.0
    %821 = vmatpush1.msra.mxu0 0.0
    %822 = vmatprep.subr.mxu0 0.0
    %823 = vmatpush1.msra.mxu0 0.0
    %824 = vmatprep.subr.mxu0 0.0
    %825 = vmatpush1.msra.mxu0 0.0
    %826 = vmatprep.subr.mxu0 0.0
    %827 = vmatpush1.msra.mxu0 0.0
    %828 = vmatprep.subr.mxu0 0.0
    %829 = vmatpush1.msra.mxu0 0.0
    %830 = vmatprep.subr.mxu0 0.0
    %831 = vmatpush1.msra.mxu0 0.0
    %832 = vmatprep.subr.mxu0 0.0
    %833 = vmatpush1.msra.mxu0 0.0
    %834 = vmatprep.subr.mxu0 0.0
    %835 = vmatpush1.msra.mxu0 0.0
    %836 = vmatprep.subr.mxu0 0.0
    %837 = vmatpush1.msra.mxu0 0.0
    %838 = vmatprep.subr.mxu0 0.0
    %839 = vmatpush1.msra.mxu0 0.0
    %840 = vmatprep.subr.mxu0 0.0
    %841 = vmatpush1.msra.mxu0 0.0
    %842 = vmatprep.subr.mxu0 0.0
    %843 = vmatpush1.msra.mxu0 0.0
    %844 = vmatprep.subr.mxu0 0.0
    %845 = vmatpush1.msra.mxu0 0.0
    %846 = vmatprep.subr.mxu0 0.0
    %847 = vmatpush1.msra.mxu0 0.0
    %848 = vmatprep.subr.mxu0 0.0
    %849 = vmatpush1.msra.mxu0 0.0
    %850 = vmatprep.subr.mxu0 0.0
    %851 = vmatpush1.msra.mxu0 0.0
    %852 = vmatprep.subr.mxu0 0.0
    %853 = vmatpush1.msra.mxu0 0.0
    %854 = vmatprep.subr.mxu0 0.0
    %855 = vmatpush1.msra.mxu0 0.0
    %856 = vmatprep.subr.mxu0 0.0
    %857 = vmatpush1.msra.mxu0 0.0
    %858 = vmatprep.subr.mxu0 0.0
    %859 = vmatpush1.msra.mxu0 0.0
    %860 = vmatprep.subr.mxu0 0.0
    %861 = vmatpush1.msra.mxu0 0.0
    %862 = vmatprep.subr.mxu0 0.0
    %863 = vmatpush1.msra.mxu0 0.0
    %864 = vmatprep.subr.mxu0 0.0
    %865 = vmatpush1.msra.mxu0 0.0
    %866 = vmatprep.subr.mxu0 0.0
    %867 = vmatpush1.msra.mxu0 0.0
    %868 = vmatprep.subr.mxu0 0.0
    %869 = vmatpush1.msra.mxu0 0.0
    %870 = vmatprep.subr.mxu0 0.0
    %871 = vmatpush1.msra.mxu0 0.0
    %872 = vmatprep.mubr.f32.mxu0 0.0
    %873 = vmatmul.mubr.f32.gmra.mrb[0].mxu0 %v722
    %v874 = vpop.f32.mrb[0].mxu0
    %v875 = vadd.f32 0.0, %v874
    %v876 = vpop.f32.mrb[0].mxu0
    %877 = vdwg.mxu0
    %v878 = vadd.f32 %v807, %v875
    %v879 = vadd.f32 %v878, %v404
    %v880 = vxor.u32 %v879, 2147483648
    %v881 = vmul.f32 %v880, 1.442695
    %v882 = vpow.pop %v881
    %v883 = vadd.f32 %v882, 1.0
    %v884 = vrcp.pop %v883
    %v885 = vmul.f32 1.0, %v884
    %v886 = vtanh.pop %v879
    %v887 = vmul.f32 %v885, %v712
    %889 = vrot.lane.b32.xlu0 %v886, 64
    %v890 = vpop.permute.xlu0 %889
    %v892 = vmul.f32 %v885, %v890
    %894 = vrot.lane.b32.xlu0 %v892, 32
    %v895 = vpop.permute.xlu0 %894
    %v897 = vadd.f32 %v887, %v895
    %v898 = vtanh.pop %v897
    %900 = vrot.lane.b32.xlu0 %v898, 64
    %v901 = vpop.permute.xlu0 %900
    %v903 = vmul.f32 %v885, %v901
    %905 = vrot.lane.b32.xlu0 %v903, 32
    %v906 = vpop.permute.xlu0 %905
    %v907 = vsel %vm248, %v906, 0
    %909 = vmatprep.subr.mxu0 0.0
    %910 = vmatpush1.msra.mxu0 %v418
    %911 = vmatprep.subr.mxu0 0.0
    %912 = vmatpush1.msra.mxu0 %v419
    %913 = vmatprep.subr.mxu0 0.0
    %914 = vmatpush1.msra.mxu0 %v420
    %915 = vmatprep.subr.mxu0 0.0
    %916 = vmatpush1.msra.mxu0 %v421
    %917 = vmatprep.subr.mxu0 0.0
    %918 = vmatpush1.msra.mxu0 0.0
    %919 = vmatprep.subr.mxu0 0.0
    %920 = vmatpush1.msra.mxu0 0.0
    %921 = vmatprep.subr.mxu0 0.0
    %922 = vmatpush1.msra.mxu0 0.0
    %923 = vmatprep.subr.mxu0 0.0
    %924 = vmatpush1.msra.mxu0 0.0
    %925 = vmatprep.subr.mxu0 0.0
    %926 = vmatpush1.msra.mxu0 0.0
    %927 = vmatprep.subr.mxu0 0.0
    %928 = vmatpush1.msra.mxu0 0.0
    %929 = vmatprep.subr.mxu0 0.0
    %930 = vmatpush1.msra.mxu0 0.0
    %931 = vmatprep.subr.mxu0 0.0
    %932 = vmatpush1.msra.mxu0 0.0
    %933 = vmatprep.subr.mxu0 0.0
    %934 = vmatpush1.msra.mxu0 0.0
    %935 = vmatprep.subr.mxu0 0.0
    %936 = vmatpush1.msra.mxu0 0.0
    %937 = vmatprep.subr.mxu0 0.0
    %938 = vmatpush1.msra.mxu0 0.0
    %939 = vmatprep.subr.mxu0 0.0
    %940 = vmatpush1.msra.mxu0 0.0
    %941 = vmatprep.subr.mxu0 0.0
    %942 = vmatpush1.msra.mxu0 0.0
    %943 = vmatprep.subr.mxu0 0.0
    %944 = vmatpush1.msra.mxu0 0.0
    %945 = vmatprep.subr.mxu0 0.0
    %946 = vmatpush1.msra.mxu0 0.0
    %947 = vmatprep.subr.mxu0 0.0
    %948 = vmatpush1.msra.mxu0 0.0
    %949 = vmatprep.subr.mxu0 0.0
    %950 = vmatpush1.msra.mxu0 0.0
    %951 = vmatprep.subr.mxu0 0.0
    %952 = vmatpush1.msra.mxu0 0.0
    %953 = vmatprep.subr.mxu0 0.0
    %954 = vmatpush1.msra.mxu0 0.0
    %955 = vmatprep.subr.mxu0 0.0
    %956 = vmatpush1.msra.mxu0 0.0
    %957 = vmatprep.subr.mxu0 0.0
    %958 = vmatpush1.msra.mxu0 0.0
    %959 = vmatprep.subr.mxu0 0.0
    %960 = vmatpush1.msra.mxu0 0.0
    %961 = vmatprep.subr.mxu0 0.0
    %962 = vmatpush1.msra.mxu0 0.0
    %963 = vmatprep.subr.mxu0 0.0
    %964 = vmatpush1.msra.mxu0 0.0
    %965 = vmatprep.subr.mxu0 0.0
    %966 = vmatpush1.msra.mxu0 0.0
    %967 = vmatprep.subr.mxu0 0.0
    %968 = vmatpush1.msra.mxu0 0.0
    %969 = vmatprep.subr.mxu0 0.0
    %970 = vmatpush1.msra.mxu0 0.0
    %971 = vmatprep.subr.mxu0 0.0
    %972 = vmatpush1.msra.mxu0 0.0
    %973 = vmatprep.mubr.f32.mxu0 0.0
    %974 = vmatmul.mubr.f32.gmra.mrb[0].mxu0 %v907
    %v975 = vpop.f32.mrb[0].mxu0
    %v976 = vadd.f32 %v528, %v975
    %v977 = vpop.f32.mrb[0].mxu0
    %978 = vdwg.mxu0
    %v979 = vmul.f32 %v976, 1.442695
    %v980 = vpow.pop %v979
    %981 = vrot.lane.b32.xlu0 %v423, 127
    %v982 = vpop.permute.xlu0 %981
    %v984 = vmul.f32 %v980, %v982
    %986 = vrot.lane.b32.xlu0 %v984, 127
    %v987 = vpop.permute.xlu0 %986
    %v989 = vadd.f32 %v976, %v987
    %991 = vset.pattern.permute.xlu0 0
    %992 = vperm.xlu0 %991, %v989
    %v993 = vpop.permute.xlu0 %992
    %v995 = vmul.f32 %v993, %v412
    %996 = vmatprep.subr.mxu0 0.0
    %997 = vmatpush1.msra.mxu0 %v414
    %998 = vmatprep.subr.mxu0 0.0
    %999 = vmatpush1.msra.mxu0 %v415
    %1000 = vmatprep.subr.mxu0 0.0
    %1001 = vmatpush1.msra.mxu0 %v416
    %1002 = vmatprep.subr.mxu0 0.0
    %1003 = vmatpush1.msra.mxu0 %v417
    %1004 = vmatprep.subr.mxu0 0.0
    %1005 = vmatpush1.msra.mxu0 0.0
    %1006 = vmatprep.subr.mxu0 0.0
    %1007 = vmatpush1.msra.mxu0 0.0
    %1008 = vmatprep.subr.mxu0 0.0
    %1009 = vmatpush1.msra.mxu0 0.0
    %1010 = vmatprep.subr.mxu0 0.0
    %1011 = vmatpush1.msra.mxu0 0.0
    %1012 = vmatprep.subr.mxu0 0.0
    %1013 = vmatpush1.msra.mxu0 0.0
    %1014 = vmatprep.subr.mxu0 0.0
    %1015 = vmatpush1.msra.mxu0 0.0
    %1016 = vmatprep.subr.mxu0 0.0
    %1017 = vmatpush1.msra.mxu0 0.0
    %1018 = vmatprep.subr.mxu0 0.0
    %1019 = vmatpush1.msra.mxu0 0.0
    %1020 = vmatprep.subr.mxu0 0.0
    %1021 = vmatpush1.msra.mxu0 0.0
    %1022 = vmatprep.subr.mxu0 0.0
    %1023 = vmatpush1.msra.mxu0 0.0
    %1024 = vmatprep.subr.mxu0 0.0
    %1025 = vmatpush1.msra.mxu0 0.0
    %1026 = vmatprep.subr.mxu0 0.0
    %1027 = vmatpush1.msra.mxu0 0.0
    %1028 = vmatprep.subr.mxu0 0.0
    %1029 = vmatpush1.msra.mxu0 0.0
    %1030 = vmatprep.subr.mxu0 0.0
    %1031 = vmatpush1.msra.mxu0 0.0
    %1032 = vmatprep.subr.mxu0 0.0
    %1033 = vmatpush1.msra.mxu0 0.0
    %1034 = vmatprep.subr.mxu0 0.0
    %1035 = vmatpush1.msra.mxu0 0.0
    %1036 = vmatprep.subr.mxu0 0.0
    %1037 = vmatpush1.msra.mxu0 0.0
    %1038 = vmatprep.subr.mxu0 0.0
    %1039 = vmatpush1.msra.mxu0 0.0
    %1040 = vmatprep.subr.mxu0 0.0
    %1041 = vmatpush1.msra.mxu0 0.0
    %1042 = vmatprep.subr.mxu0 0.0
    %1043 = vmatpush1.msra.mxu0 0.0
    %1044 = vmatprep.subr.mxu0 0.0
    %1045 = vmatpush1.msra.mxu0 0.0
    %1046 = vmatprep.subr.mxu0 0.0
    %1047 = vmatpush1.msra.mxu0 0.0
    %1048 = vmatprep.subr.mxu0 0.0
    %1049 = vmatpush1.msra.mxu0 0.0
    %1050 = vmatprep.subr.mxu0 0.0
    %1051 = vmatpush1.msra.mxu0 0.0
    %1052 = vmatprep.subr.mxu0 0.0
    %1053 = vmatpush1.msra.mxu0 0.0
    %1054 = vmatprep.subr.mxu0 0.0
    %1055 = vmatpush1.msra.mxu0 0.0
    %1056 = vmatprep.subr.mxu0 0.0
    %1057 = vmatpush1.msra.mxu0 0.0
    %1058 = vmatprep.subr.mxu0 0.0
    %1059 = vmatpush1.msra.mxu0 0.0
    %1060 = vmatprep.mubr.f32.mxu0 0.0
    %1061 = vmatmul.mubr.f32.gmra.mrb[0].mxu0 %v907
    %v1062 = vpop.f32.mrb[0].mxu0
    %v1063 = vadd.f32 0.0, %v1062
    %v1064 = vpop.f32.mrb[0].mxu0
    %1065 = vdwg.mxu0
    %v1066 = vadd.f32 %v995, %v1063
    %v1067 = vadd.f32 %v1066, %v404
    %v1068 = vxor.u32 %v1067, 2147483648
    %v1069 = vmul.f32 %v1068, 1.442695
    %v1070 = vpow.pop %v1069
    %v1071 = vadd.f32 %v1070, 1.0
    %v1072 = vrcp.pop %v1071
    %v1073 = vmul.f32 1.0, %v1072
    %v1074 = vtanh.pop %v1067
    %v1075 = vmul.f32 %v1073, %v897
    %1077 = vrot.lane.b32.xlu0 %v1074, 64
    %v1078 = vpop.permute.xlu0 %1077
    %v1080 = vmul.f32 %v1073, %v1078
    %1082 = vrot.lane.b32.xlu0 %v1080, 32
    %v1083 = vpop.permute.xlu0 %1082
    %v1085 = vadd.f32 %v1075, %v1083
    %v1086 = vtanh.pop %v1085
    %1088 = vrot.lane.b32.xlu0 %v1086, 64
    %v1089 = vpop.permute.xlu0 %1088
    %v1091 = vmul.f32 %v1073, %v1089
    %1093 = vrot.lane.b32.xlu0 %v1091, 32
    %v1094 = vpop.permute.xlu0 %1093
    %v1095 = vsel %vm248, %v1094, 0
    %1097 = vmatprep.subr.mxu0 0.0
    %1098 = vmatpush1.msra.mxu0 %v418
    %1099 = vmatprep.subr.mxu0 0.0
    %1100 = vmatpush1.msra.mxu0 %v419
    %1101 = vmatprep.subr.mxu0 0.0
    %1102 = vmatpush1.msra.mxu0 %v420
    %1103 = vmatprep.subr.mxu0 0.0
    %1104 = vmatpush1.msra.mxu0 %v421
    %1105 = vmatprep.subr.mxu0 0.0
    %1106 = vmatpush1.msra.mxu0 0.0
    %1107 = vmatprep.subr.mxu0 0.0
    %1108 = vmatpush1.msra.mxu0 0.0
    %1109 = vmatprep.subr.mxu0 0.0
    %1110 = vmatpush1.msra.mxu0 0.0
    %1111 = vmatprep.subr.mxu0 0.0
    %1112 = vmatpush1.msra.mxu0 0.0
    %1113 = vmatprep.subr.mxu0 0.0
    %1114 = vmatpush1.msra.mxu0 0.0
    %1115 = vmatprep.subr.mxu0 0.0
    %1116 = vmatpush1.msra.mxu0 0.0
    %1117 = vmatprep.subr.mxu0 0.0
    %1118 = vmatpush1.msra.mxu0 0.0
    %1119 = vmatprep.subr.mxu0 0.0
    %1120 = vmatpush1.msra.mxu0 0.0
    %1121 = vmatprep.subr.mxu0 0.0
    %1122 = vmatpush1.msra.mxu0 0.0
    %1123 = vmatprep.subr.mxu0 0.0
    %1124 = vmatpush1.msra.mxu0 0.0
    %1125 = vmatprep.subr.mxu0 0.0
    %1126 = vmatpush1.msra.mxu0 0.0
    %1127 = vmatprep.subr.mxu0 0.0
    %1128 = vmatpush1.msra.mxu0 0.0
    %1129 = vmatprep.subr.mxu0 0.0
    %1130 = vmatpush1.msra.mxu0 0.0
    %1131 = vmatprep.subr.mxu0 0.0
    %1132 = vmatpush1.msra.mxu0 0.0
    %1133 = vmatprep.subr.mxu0 0.0
    %1134 = vmatpush1.msra.mxu0 0.0
    %1135 = vmatprep.subr.mxu0 0.0
    %1136 = vmatpush1.msra.mxu0 0.0
    %1137 = vmatprep.subr.mxu0 0.0
    %1138 = vmatpush1.msra.mxu0 0.0
    %1139 = vmatprep.subr.mxu0 0.0
    %1140 = vmatpush1.msra.mxu0 0.0
    %1141 = vmatprep.subr.mxu0 0.0
    %1142 = vmatpush1.msra.mxu0 0.0
    %1143 = vmatprep.subr.mxu0 0.0
    %1144 = vmatpush1.msra.mxu0 0.0
    %1145 = vmatprep.subr.mxu0 0.0
    %1146 = vmatpush1.msra.mxu0 0.0
    %1147 = vmatprep.subr.mxu0 0.0
    %1148 = vmatpush1.msra.mxu0 0.0
    %1149 = vmatprep.subr.mxu0 0.0
    %1150 = vmatpush1.msra.mxu0 0.0
    %1151 = vmatprep.subr.mxu0 0.0
    %1152 = vmatpush1.msra.mxu0 0.0
    %1153 = vmatprep.subr.mxu0 0.0
    %1154 = vmatpush1.msra.mxu0 0.0
    %1155 = vmatprep.subr.mxu0 0.0
    %1156 = vmatpush1.msra.mxu0 0.0
    %1157 = vmatprep.subr.mxu0 0.0
    %1158 = vmatpush1.msra.mxu0 0.0
    %1159 = vmatprep.subr.mxu0 0.0
    %1160 = vmatpush1.msra.mxu0 0.0
    %1161 = vmatprep.mubr.f32.mxu0 0.0
    %1162 = vmatmul.mubr.f32.gmra.mrb[0].mxu0 %v1095
    %v1163 = vpop.f32.mrb[0].mxu0
    %v1164 = vadd.f32 %v528, %v1163
    %v1165 = vpop.f32.mrb[0].mxu0
    %1166 = vdwg.mxu0
    %v1167 = vmul.f32 %v1164, 1.442695
    %v1168 = vpow.pop %v1167
    %1169 = vrot.lane.b32.xlu0 %v423, 126
    %v1170 = vpop.permute.xlu0 %1169
    %v1172 = vmul.f32 %v1168, %v1170
    %1174 = vrot.lane.b32.xlu0 %v1172, 127
    %v1175 = vpop.permute.xlu0 %1174
    %v1177 = vadd.f32 %v1164, %v1175
    %1179 = vset.pattern.permute.xlu0 0
    %1180 = vperm.xlu0 %1179, %v1177
    %v1181 = vpop.permute.xlu0 %1180
    %v1183 = vmul.f32 %v1181, %v412
    %1184 = vmatprep.subr.mxu0 0.0
    %1185 = vmatpush1.msra.mxu0 %v414
    %1186 = vmatprep.subr.mxu0 0.0
    %1187 = vmatpush1.msra.mxu0 %v415
    %1188 = vmatprep.subr.mxu0 0.0
    %1189 = vmatpush1.msra.mxu0 %v416
    %1190 = vmatprep.subr.mxu0 0.0
    %1191 = vmatpush1.msra.mxu0 %v417
    %1192 = vmatprep.subr.mxu0 0.0
    %1193 = vmatpush1.msra.mxu0 0.0
    %1194 = vmatprep.subr.mxu0 0.0
    %1195 = vmatpush1.msra.mxu0 0.0
    %1196 = vmatprep.subr.mxu0 0.0
    %1197 = vmatpush1.msra.mxu0 0.0
    %1198 = vmatprep.subr.mxu0 0.0
    %1199 = vmatpush1.msra.mxu0 0.0
    %1200 = vmatprep.subr.mxu0 0.0
    %1201 = vmatpush1.msra.mxu0 0.0
    %1202 = vmatprep.subr.mxu0 0.0
    %1203 = vmatpush1.msra.mxu0 0.0
    %1204 = vmatprep.subr.mxu0 0.0
    %1205 = vmatpush1.msra.mxu0 0.0
    %1206 = vmatprep.subr.mxu0 0.0
    %1207 = vmatpush1.msra.mxu0 0.0
    %1208 = vmatprep.subr.mxu0 0.0
    %1209 = vmatpush1.msra.mxu0 0.0
    %1210 = vmatprep.subr.mxu0 0.0
    %1211 = vmatpush1.msra.mxu0 0.0
    %1212 = vmatprep.subr.mxu0 0.0
    %1213 = vmatpush1.msra.mxu0 0.0
    %1214 = vmatprep.subr.mxu0 0.0
    %1215 = vmatpush1.msra.mxu0 0.0
    %1216 = vmatprep.subr.mxu0 0.0
    %1217 = vmatpush1.msra.mxu0 0.0
    %1218 = vmatprep.subr.mxu0 0.0
    %1219 = vmatpush1.msra.mxu0 0.0
    %1220 = vmatprep.subr.mxu0 0.0
    %1221 = vmatpush1.msra.mxu0 0.0
    %1222 = vmatprep.subr.mxu0 0.0
    %1223 = vmatpush1.msra.mxu0 0.0
    %1224 = vmatprep.subr.mxu0 0.0
    %1225 = vmatpush1.msra.mxu0 0.0
    %1226 = vmatprep.subr.mxu0 0.0
    %1227 = vmatpush1.msra.mxu0 0.0
    %1228 = vmatprep.subr.mxu0 0.0
    %1229 = vmatpush1.msra.mxu0 0.0
    %1230 = vmatprep.subr.mxu0 0.0
    %1231 = vmatpush1.msra.mxu0 0.0
    %1232 = vmatprep.subr.mxu0 0.0
    %1233 = vmatpush1.msra.mxu0 0.0
    %1234 = vmatprep.subr.mxu0 0.0
    %1235 = vmatpush1.msra.mxu0 0.0
    %1236 = vmatprep.subr.mxu0 0.0
    %1237 = vmatpush1.msra.mxu0 0.0
    %1238 = vmatprep.subr.mxu0 0.0
    %1239 = vmatpush1.msra.mxu0 0.0
    %1240 = vmatprep.subr.mxu0 0.0
    %1241 = vmatpush1.msra.mxu0 0.0
    %1242 = vmatprep.subr.mxu0 0.0
    %1243 = vmatpush1.msra.mxu0 0.0
    %1244 = vmatprep.subr.mxu0 0.0
    %1245 = vmatpush1.msra.mxu0 0.0
    %1246 = vmatprep.subr.mxu0 0.0
    %1247 = vmatpush1.msra.mxu0 0.0
    %1248 = vmatprep.mubr.f32.mxu0 0.0
    %1249 = vmatmul.mubr.f32.gmra.mrb[0].mxu0 %v1095
    %v1250 = vpop.f32.mrb[0].mxu0
    %v1251 = vadd.f32 0.0, %v1250
    %v1252 = vpop.f32.mrb[0].mxu0
    %1253 = vdwg.mxu0
    %v1254 = vadd.f32 %v1183, %v1251
    %v1255 = vadd.f32 %v1254, %v404
    %v1256 = vxor.u32 %v1255, 2147483648
    %v1257 = vmul.f32 %v1256, 1.442695
    %v1258 = vpow.pop %v1257
    %v1259 = vadd.f32 %v1258, 1.0
    %v1260 = vrcp.pop %v1259
    %v1261 = vmul.f32 1.0, %v1260
    %v1262 = vtanh.pop %v1255
    %v1263 = vmul.f32 %v1261, %v1085
    %1265 = vrot.lane.b32.xlu0 %v1262, 64
    %v1266 = vpop.permute.xlu0 %1265
    %v1268 = vmul.f32 %v1261, %v1266
    %1270 = vrot.lane.b32.xlu0 %v1268, 32
    %v1271 = vpop.permute.xlu0 %1270
    %v1273 = vadd.f32 %v1263, %v1271
    %v1274 = vtanh.pop %v1273
    %1276 = vrot.lane.b32.xlu0 %v1274, 64
    %v1277 = vpop.permute.xlu0 %1276
    %v1279 = vmul.f32 %v1261, %v1277
    %1281 = vrot.lane.b32.xlu0 %v1279, 32
    %v1282 = vpop.permute.xlu0 %1281
    %v1283 = vsel %vm248, %v1282, 0
    %1285 = vmatprep.subr.mxu0 0.0
    %1286 = vmatpush1.msra.mxu0 %v418
    %1287 = vmatprep.subr.mxu0 0.0
    %1288 = vmatpush1.msra.mxu0 %v419
    %1289 = vmatprep.subr.mxu0 0.0
    %1290 = vmatpush1.msra.mxu0 %v420
    %1291 = vmatprep.subr.mxu0 0.0
    %1292 = vmatpush1.msra.mxu0 %v421
    %1293 = vmatprep.subr.mxu0 0.0
    %1294 = vmatpush1.msra.mxu0 0.0
    %1295 = vmatprep.subr.mxu0 0.0
    %1296 = vmatpush1.msra.mxu0 0.0
    %1297 = vmatprep.subr.mxu0 0.0
    %1298 = vmatpush1.msra.mxu0 0.0
    %1299 = vmatprep.subr.mxu0 0.0
    %1300 = vmatpush1.msra.mxu0 0.0
    %1301 = vmatprep.subr.mxu0 0.0
    %1302 = vmatpush1.msra.mxu0 0.0
    %1303 = vmatprep.subr.mxu0 0.0
    %1304 = vmatpush1.msra.mxu0 0.0
    %1305 = vmatprep.subr.mxu0 0.0
    %1306 = vmatpush1.msra.mxu0 0.0
    %1307 = vmatprep.subr.mxu0 0.0
    %1308 = vmatpush1.msra.mxu0 0.0
    %1309 = vmatprep.subr.mxu0 0.0
    %1310 = vmatpush1.msra.mxu0 0.0
    %1311 = vmatprep.subr.mxu0 0.0
    %1312 = vmatpush1.msra.mxu0 0.0
    %1313 = vmatprep.subr.mxu0 0.0
    %1314 = vmatpush1.msra.mxu0 0.0
    %1315 = vmatprep.subr.mxu0 0.0
    %1316 = vmatpush1.msra.mxu0 0.0
    %1317 = vmatprep.subr.mxu0 0.0
    %1318 = vmatpush1.msra.mxu0 0.0
    %1319 = vmatprep.subr.mxu0 0.0
    %1320 = vmatpush1.msra.mxu0 0.0
    %1321 = vmatprep.subr.mxu0 0.0
    %1322 = vmatpush1.msra.mxu0 0.0
    %1323 = vmatprep.subr.mxu0 0.0
    %1324 = vmatpush1.msra.mxu0 0.0
    %1325 = vmatprep.subr.mxu0 0.0
    %1326 = vmatpush1.msra.mxu0 0.0
    %1327 = vmatprep.subr.mxu0 0.0
    %1328 = vmatpush1.msra.mxu0 0.0
    %1329 = vmatprep.subr.mxu0 0.0
    %1330 = vmatpush1.msra.mxu0 0.0
    %1331 = vmatprep.subr.mxu0 0.0
    %1332 = vmatpush1.msra.mxu0 0.0
    %1333 = vmatprep.subr.mxu0 0.0
    %1334 = vmatpush1.msra.mxu0 0.0
    %1335 = vmatprep.subr.mxu0 0.0
    %1336 = vmatpush1.msra.mxu0 0.0
    %1337 = vmatprep.subr.mxu0 0.0
    %1338 = vmatpush1.msra.mxu0 0.0
    %1339 = vmatprep.subr.mxu0 0.0
    %1340 = vmatpush1.msra.mxu0 0.0
    %1341 = vmatprep.subr.mxu0 0.0
    %1342 = vmatpush1.msra.mxu0 0.0
    %1343 = vmatprep.subr.mxu0 0.0
    %1344 = vmatpush1.msra.mxu0 0.0
    %1345 = vmatprep.subr.mxu0 0.0
    %1346 = vmatpush1.msra.mxu0 0.0
    %1347 = vmatprep.subr.mxu0 0.0
    %1348 = vmatpush1.msra.mxu0 0.0
    %1349 = vmatprep.mubr.f32.mxu0 0.0
    %1350 = vmatmul.mubr.f32.gmra.mrb[0].mxu0 %v1283
    %v1351 = vpop.f32.mrb[0].mxu0
    %v1352 = vadd.f32 %v528, %v1351
    %v1353 = vpop.f32.mrb[0].mxu0
    %1354 = vdwg.mxu0
    %v1355 = vmul.f32 %v1352, 1.442695
    %v1356 = vpow.pop %v1355
    %1357 = vrot.lane.b32.xlu0 %v423, 125
    %v1358 = vpop.permute.xlu0 %1357
    %v1360 = vmul.f32 %v1356, %v1358
    %1362 = vrot.lane.b32.xlu0 %v1360, 127
    %v1363 = vpop.permute.xlu0 %1362
    %v1365 = vadd.f32 %v1352, %v1363
    %1367 = vset.pattern.permute.xlu0 0
    %1368 = vperm.xlu0 %1367, %v1365
    %v1369 = vpop.permute.xlu0 %1368
    %v1371 = vmul.f32 %v1369, %v412
    %1372 = vmatprep.subr.mxu0 0.0
    %1373 = vmatpush1.msra.mxu0 %v414
    %1374 = vmatprep.subr.mxu0 0.0
    %1375 = vmatpush1.msra.mxu0 %v415
    %1376 = vmatprep.subr.mxu0 0.0
    %1377 = vmatpush1.msra.mxu0 %v416
    %1378 = vmatprep.subr.mxu0 0.0
    %1379 = vmatpush1.msra.mxu0 %v417
    %1380 = vmatprep.subr.mxu0 0.0
    %1381 = vmatpush1.msra.mxu0 0.0
    %1382 = vmatprep.subr.mxu0 0.0
    %1383 = vmatpush1.msra.mxu0 0.0
    %1384 = vmatprep.subr.mxu0 0.0
    %1385 = vmatpush1.msra.mxu0 0.0
    %1386 = vmatprep.subr.mxu0 0.0
    %1387 = vmatpush1.msra.mxu0 0.0
    %1388 = vmatprep.subr.mxu0 0.0
    %1389 = vmatpush1.msra.mxu0 0.0
    %1390 = vmatprep.subr.mxu0 0.0
    %1391 = vmatpush1.msra.mxu0 0.0
    %1392 = vmatprep.subr.mxu0 0.0
    %1393 = vmatpush1.msra.mxu0 0.0
    %1394 = vmatprep.subr.mxu0 0.0
    %1395 = vmatpush1.msra.mxu0 0.0
    %1396 = vmatprep.subr.mxu0 0.0
    %1397 = vmatpush1.msra.mxu0 0.0
    %1398 = vmatprep.subr.mxu0 0.0
    %1399 = vmatpush1.msra.mxu0 0.0
    %1400 = vmatprep.subr.mxu0 0.0
    %1401 = vmatpush1.msra.mxu0 0.0
    %1402 = vmatprep.subr.mxu0 0.0
    %1403 = vmatpush1.msra.mxu0 0.0
    %1404 = vmatprep.subr.mxu0 0.0
    %1405 = vmatpush1.msra.mxu0 0.0
    %1406 = vmatprep.subr.mxu0 0.0
    %1407 = vmatpush1.msra.mxu0 0.0
    %1408 = vmatprep.subr.mxu0 0.0
    %1409 = vmatpush1.msra.mxu0 0.0
    %1410 = vmatprep.subr.mxu0 0.0
    %1411 = vmatpush1.msra.mxu0 0.0
    %1412 = vmatprep.subr.mxu0 0.0
    %1413 = vmatpush1.msra.mxu0 0.0
    %1414 = vmatprep.subr.mxu0 0.0
    %1415 = vmatpush1.msra.mxu0 0.0
    %1416 = vmatprep.subr.mxu0 0.0
    %1417 = vmatpush1.msra.mxu0 0.0
    %1418 = vmatprep.subr.mxu0 0.0
    %1419 = vmatpush1.msra.mxu0 0.0
    %1420 = vmatprep.subr.mxu0 0.0
    %1421 = vmatpush1.msra.mxu0 0.0
    %1422 = vmatprep.subr.mxu0 0.0
    %1423 = vmatpush1.msra.mxu0 0.0
    %1424 = vmatprep.subr.mxu0 0.0
    %1425 = vmatpush1.msra.mxu0 0.0
    %1426 = vmatprep.subr.mxu0 0.0
    %1427 = vmatpush1.msra.mxu0 0.0
    %1428 = vmatprep.subr.mxu0 0.0
    %1429 = vmatpush1.msra.mxu0 0.0
    %1430 = vmatprep.subr.mxu0 0.0
    %1431 = vmatpush1.msra.mxu0 0.0
    %1432 = vmatprep.subr.mxu0 0.0
    %1433 = vmatpush1.msra.mxu0 0.0
    %1434 = vmatprep.subr.mxu0 0.0
    %1435 = vmatpush1.msra.mxu0 0.0
    %1436 = vmatprep.mubr.f32.mxu0 0.0
    %1437 = vmatmul.mubr.f32.gmra.mrb[0].mxu0 %v1283
    %v1438 = vpop.f32.mrb[0].mxu0
    %v1439 = vadd.f32 0.0, %v1438
    %v1440 = vpop.f32.mrb[0].mxu0
    %1441 = vdwg.mxu0
    %v1442 = vadd.f32 %v1371, %v1439
    %v1443 = vadd.f32 %v1442, %v404
    %v1444 = vxor.u32 %v1443, 2147483648
    %v1445 = vmul.f32 %v1444, 1.442695
    %v1446 = vpow.pop %v1445
    %v1447 = vadd.f32 %v1446, 1.0
    %v1448 = vrcp.pop %v1447
    %v1449 = vmul.f32 1.0, %v1448
    %v1450 = vtanh.pop %v1443
    %v1451 = vmul.f32 %v1449, %v1273
    %1453 = vrot.lane.b32.xlu0 %v1450, 64
    %v1454 = vpop.permute.xlu0 %1453
    %v1456 = vmul.f32 %v1449, %v1454
    %1458 = vrot.lane.b32.xlu0 %v1456, 32
    %v1459 = vpop.permute.xlu0 %1458
    %v1461 = vadd.f32 %v1451, %v1459
    %v1462 = vtanh.pop %v1461
    %1464 = vrot.lane.b32.xlu0 %v1462, 64
    %v1465 = vpop.permute.xlu0 %1464
    %v1467 = vmul.f32 %v1449, %v1465
    %1469 = vrot.lane.b32.xlu0 %v1467, 32
    %v1470 = vpop.permute.xlu0 %1469
    %v1471 = vsel %vm248, %v1470, 0
    %1473 = vmatprep.subr.mxu0 0.0
    %1474 = vmatpush1.msra.mxu0 %v418
    %1475 = vmatprep.subr.mxu0 0.0
    %1476 = vmatpush1.msra.mxu0 %v419
    %1477 = vmatprep.subr.mxu0 0.0
    %1478 = vmatpush1.msra.mxu0 %v420
    %1479 = vmatprep.subr.mxu0 0.0
    %1480 = vmatpush1.msra.mxu0 %v421
    %1481 = vmatprep.subr.mxu0 0.0
    %1482 = vmatpush1.msra.mxu0 0.0
    %1483 = vmatprep.subr.mxu0 0.0
    %1484 = vmatpush1.msra.mxu0 0.0
    %1485 = vmatprep.subr.mxu0 0.0
    %1486 = vmatpush1.msra.mxu0 0.0
    %1487 = vmatprep.subr.mxu0 0.0
    %1488 = vmatpush1.msra.mxu0 0.0
    %1489 = vmatprep.subr.mxu0 0.0
    %1490 = vmatpush1.msra.mxu0 0.0
    %1491 = vmatprep.subr.mxu0 0.0
    %1492 = vmatpush1.msra.mxu0 0.0
    %1493 = vmatprep.subr.mxu0 0.0
    %1494 = vmatpush1.msra.mxu0 0.0
    %1495 = vmatprep.subr.mxu0 0.0
    %1496 = vmatpush1.msra.mxu0 0.0
    %1497 = vmatprep.subr.mxu0 0.0
    %1498 = vmatpush1.msra.mxu0 0.0
    %1499 = vmatprep.subr.mxu0 0.0
    %1500 = vmatpush1.msra.mxu0 0.0
    %1501 = vmatprep.subr.mxu0 0.0
    %1502 = vmatpush1.msra.mxu0 0.0
    %1503 = vmatprep.subr.mxu0 0.0
    %1504 = vmatpush1.msra.mxu0 0.0
    %1505 = vmatprep.subr.mxu0 0.0
    %1506 = vmatpush1.msra.mxu0 0.0
    %1507 = vmatprep.subr.mxu0 0.0
    %1508 = vmatpush1.msra.mxu0 0.0
    %1509 = vmatprep.subr.mxu0 0.0
    %1510 = vmatpush1.msra.mxu0 0.0
    %1511 = vmatprep.subr.mxu0 0.0
    %1512 = vmatpush1.msra.mxu0 0.0
    %1513 = vmatprep.subr.mxu0 0.0
    %1514 = vmatpush1.msra.mxu0 0.0
    %1515 = vmatprep.subr.mxu0 0.0
    %1516 = vmatpush1.msra.mxu0 0.0
    %1517 = vmatprep.subr.mxu0 0.0
    %1518 = vmatpush1.msra.mxu0 0.0
    %1519 = vmatprep.subr.mxu0 0.0
    %1520 = vmatpush1.msra.mxu0 0.0
    %1521 = vmatprep.subr.mxu0 0.0
    %1522 = vmatpush1.msra.mxu0 0.0
    %1523 = vmatprep.subr.mxu0 0.0
    %1524 = vmatpush1.msra.mxu0 0.0
    %1525 = vmatprep.subr.mxu0 0.0
    %1526 = vmatpush1.msra.mxu0 0.0
    %1527 = vmatprep.subr.mxu0 0.0
    %1528 = vmatpush1.msra.mxu0 0.0
    %1529 = vmatprep.subr.mxu0 0.0
    %1530 = vmatpush1.msra.mxu0 0.0
    %1531 = vmatprep.subr.mxu0 0.0
    %1532 = vmatpush1.msra.mxu0 0.0
    %1533 = vmatprep.subr.mxu0 0.0
    %1534 = vmatpush1.msra.mxu0 0.0
    %1535 = vmatprep.subr.mxu0 0.0
    %1536 = vmatpush1.msra.mxu0 0.0
    %1537 = vmatprep.mubr.f32.mxu0 0.0
    %1538 = vmatmul.mubr.f32.gmra.mrb[0].mxu0 %v1471
    %v1539 = vpop.f32.mrb[0].mxu0
    %v1540 = vadd.f32 %v528, %v1539
    %v1541 = vpop.f32.mrb[0].mxu0
    %1542 = vdwg.mxu0
    %v1543 = vmul.f32 %v1540, 1.442695
    %v1544 = vpow.pop %v1543
    %1545 = vrot.lane.b32.xlu0 %v423, 124
    %v1546 = vpop.permute.xlu0 %1545
    %v1548 = vmul.f32 %v1544, %v1546
    %1550 = vrot.lane.b32.xlu0 %v1548, 127
    %v1551 = vpop.permute.xlu0 %1550
    %v1553 = vadd.f32 %v1540, %v1551
    %1555 = vset.pattern.permute.xlu0 0
    %1556 = vperm.xlu0 %1555, %v1553
    %v1557 = vpop.permute.xlu0 %1556
    %v1559 = vmul.f32 %v1557, %v412
    %1560 = vmatprep.subr.mxu0 0.0
    %1561 = vmatpush1.msra.mxu0 %v414
    %1562 = vmatprep.subr.mxu0 0.0
    %1563 = vmatpush1.msra.mxu0 %v415
    %1564 = vmatprep.subr.mxu0 0.0
    %1565 = vmatpush1.msra.mxu0 %v416
    %1566 = vmatprep.subr.mxu0 0.0
    %1567 = vmatpush1.msra.mxu0 %v417
    %1568 = vmatprep.subr.mxu0 0.0
    %1569 = vmatpush1.msra.mxu0 0.0
    %1570 = vmatprep.subr.mxu0 0.0
    %1571 = vmatpush1.msra.mxu0 0.0
    %1572 = vmatprep.subr.mxu0 0.0
    %1573 = vmatpush1.msra.mxu0 0.0
    %1574 = vmatprep.subr.mxu0 0.0
    %1575 = vmatpush1.msra.mxu0 0.0
    %1576 = vmatprep.subr.mxu0 0.0
    %1577 = vmatpush1.msra.mxu0 0.0
    %1578 = vmatprep.subr.mxu0 0.0
    %1579 = vmatpush1.msra.mxu0 0.0
    %1580 = vmatprep.subr.mxu0 0.0
    %1581 = vmatpush1.msra.mxu0 0.0
    %1582 = vmatprep.subr.mxu0 0.0
    %1583 = vmatpush1.msra.mxu0 0.0
    %1584 = vmatprep.subr.mxu0 0.0
    %1585 = vmatpush1.msra.mxu0 0.0
    %1586 = vmatprep.subr.mxu0 0.0
    %1587 = vmatpush1.msra.mxu0 0.0
    %1588 = vmatprep.subr.mxu0 0.0
    %1589 = vmatpush1.msra.mxu0 0.0
    %1590 = vmatprep.subr.mxu0 0.0
    %1591 = vmatpush1.msra.mxu0 0.0
    %1592 = vmatprep.subr.mxu0 0.0
    %1593 = vmatpush1.msra.mxu0 0.0
    %1594 = vmatprep.subr.mxu0 0.0
    %1595 = vmatpush1.msra.mxu0 0.0
    %1596 = vmatprep.subr.mxu0 0.0
    %1597 = vmatpush1.msra.mxu0 0.0
    %1598 = vmatprep.subr.mxu0 0.0
    %1599 = vmatpush1.msra.mxu0 0.0
    %1600 = vmatprep.subr.mxu0 0.0
    %1601 = vmatpush1.msra.mxu0 0.0
    %1602 = vmatprep.subr.mxu0 0.0
    %1603 = vmatpush1.msra.mxu0 0.0
    %1604 = vmatprep.subr.mxu0 0.0
    %1605 = vmatpush1.msra.mxu0 0.0
    %1606 = vmatprep.subr.mxu0 0.0
    %1607 = vmatpush1.msra.mxu0 0.0
    %1608 = vmatprep.subr.mxu0 0.0
    %1609 = vmatpush1.msra.mxu0 0.0
    %1610 = vmatprep.subr.mxu0 0.0
    %1611 = vmatpush1.msra.mxu0 0.0
    %1612 = vmatprep.subr.mxu0 0.0
    %1613 = vmatpush1.msra.mxu0 0.0
    %1614 = vmatprep.subr.mxu0 0.0
    %1615 = vmatpush1.msra.mxu0 0.0
    %1616 = vmatprep.subr.mxu0 0.0
    %1617 = vmatpush1.msra.mxu0 0.0
    %1618 = vmatprep.subr.mxu0 0.0
    %1619 = vmatpush1.msra.mxu0 0.0
    %1620 = vmatprep.subr.mxu0 0.0
    %1621 = vmatpush1.msra.mxu0 0.0
    %1622 = vmatprep.subr.mxu0 0.0
    %1623 = vmatpush1.msra.mxu0 0.0
    %1624 = vmatprep.mubr.f32.mxu0 0.0
    %1625 = vmatmul.mubr.f32.gmra.mrb[0].mxu0 %v1471
    %v1626 = vpop.f32.mrb[0].mxu0
    %v1627 = vadd.f32 0.0, %v1626
    %v1628 = vpop.f32.mrb[0].mxu0
    %1629 = vdwg.mxu0
    %v1630 = vadd.f32 %v1559, %v1627
    %v1631 = vadd.f32 %v1630, %v404
    %v1632 = vxor.u32 %v1631, 2147483648
    %v1633 = vmul.f32 %v1632, 1.442695
    %v1634 = vpow.pop %v1633
    %v1635 = vadd.f32 %v1634, 1.0
    %v1636 = vrcp.pop %v1635
    %v1637 = vmul.f32 1.0, %v1636
    %v1638 = vtanh.pop %v1631
    %v1639 = vmul.f32 %v1637, %v1461
    %1641 = vrot.lane.b32.xlu0 %v1638, 64
    %v1642 = vpop.permute.xlu0 %1641
    %v1644 = vmul.f32 %v1637, %v1642
    %1646 = vrot.lane.b32.xlu0 %v1644, 32
    %v1647 = vpop.permute.xlu0 %1646
    %v1649 = vadd.f32 %v1639, %v1647
    %v1650 = vtanh.pop %v1649
    %1652 = vrot.lane.b32.xlu0 %v1650, 64
    %v1653 = vpop.permute.xlu0 %1652
    %v1655 = vmul.f32 %v1637, %v1653
    %1657 = vrot.lane.b32.xlu0 %v1655, 32
    %v1658 = vpop.permute.xlu0 %1657
    %v1659 = vsel %vm248, %v1658, 0
    %1661 = vmatprep.subr.mxu0 0.0
    %1662 = vmatpush1.msra.mxu0 %v418
    %1663 = vmatprep.subr.mxu0 0.0
    %1664 = vmatpush1.msra.mxu0 %v419
    %1665 = vmatprep.subr.mxu0 0.0
    %1666 = vmatpush1.msra.mxu0 %v420
    %1667 = vmatprep.subr.mxu0 0.0
    %1668 = vmatpush1.msra.mxu0 %v421
    %1669 = vmatprep.subr.mxu0 0.0
    %1670 = vmatpush1.msra.mxu0 0.0
    %1671 = vmatprep.subr.mxu0 0.0
    %1672 = vmatpush1.msra.mxu0 0.0
    %1673 = vmatprep.subr.mxu0 0.0
    %1674 = vmatpush1.msra.mxu0 0.0
    %1675 = vmatprep.subr.mxu0 0.0
    %1676 = vmatpush1.msra.mxu0 0.0
    %1677 = vmatprep.subr.mxu0 0.0
    %1678 = vmatpush1.msra.mxu0 0.0
    %1679 = vmatprep.subr.mxu0 0.0
    %1680 = vmatpush1.msra.mxu0 0.0
    %1681 = vmatprep.subr.mxu0 0.0
    %1682 = vmatpush1.msra.mxu0 0.0
    %1683 = vmatprep.subr.mxu0 0.0
    %1684 = vmatpush1.msra.mxu0 0.0
    %1685 = vmatprep.subr.mxu0 0.0
    %1686 = vmatpush1.msra.mxu0 0.0
    %1687 = vmatprep.subr.mxu0 0.0
    %1688 = vmatpush1.msra.mxu0 0.0
    %1689 = vmatprep.subr.mxu0 0.0
    %1690 = vmatpush1.msra.mxu0 0.0
    %1691 = vmatprep.subr.mxu0 0.0
    %1692 = vmatpush1.msra.mxu0 0.0
    %1693 = vmatprep.subr.mxu0 0.0
    %1694 = vmatpush1.msra.mxu0 0.0
    %1695 = vmatprep.subr.mxu0 0.0
    %1696 = vmatpush1.msra.mxu0 0.0
    %1697 = vmatprep.subr.mxu0 0.0
    %1698 = vmatpush1.msra.mxu0 0.0
    %1699 = vmatprep.subr.mxu0 0.0
    %1700 = vmatpush1.msra.mxu0 0.0
    %1701 = vmatprep.subr.mxu0 0.0
    %1702 = vmatpush1.msra.mxu0 0.0
    %1703 = vmatprep.subr.mxu0 0.0
    %1704 = vmatpush1.msra.mxu0 0.0
    %1705 = vmatprep.subr.mxu0 0.0
    %1706 = vmatpush1.msra.mxu0 0.0
    %1707 = vmatprep.subr.mxu0 0.0
    %1708 = vmatpush1.msra.mxu0 0.0
    %1709 = vmatprep.subr.mxu0 0.0
    %1710 = vmatpush1.msra.mxu0 0.0
    %1711 = vmatprep.subr.mxu0 0.0
    %1712 = vmatpush1.msra.mxu0 0.0
    %1713 = vmatprep.subr.mxu0 0.0
    %1714 = vmatpush1.msra.mxu0 0.0
    %1715 = vmatprep.subr.mxu0 0.0
    %1716 = vmatpush1.msra.mxu0 0.0
    %1717 = vmatprep.subr.mxu0 0.0
    %1718 = vmatpush1.msra.mxu0 0.0
    %1719 = vmatprep.subr.mxu0 0.0
    %1720 = vmatpush1.msra.mxu0 0.0
    %1721 = vmatprep.subr.mxu0 0.0
    %1722 = vmatpush1.msra.mxu0 0.0
    %1723 = vmatprep.subr.mxu0 0.0
    %1724 = vmatpush1.msra.mxu0 0.0
    %1725 = vmatprep.mubr.f32.mxu0 0.0
    %1726 = vmatmul.mubr.f32.gmra.mrb[0].mxu0 %v1659
    %v1727 = vpop.f32.mrb[0].mxu0
    %v1728 = vadd.f32 %v528, %v1727
    %v1729 = vpop.f32.mrb[0].mxu0
    %1730 = vdwg.mxu0
    %v1731 = vmul.f32 %v1728, 1.442695
    %v1732 = vpow.pop %v1731
    %1733 = vrot.lane.b32.xlu0 %v423, 123
    %v1734 = vpop.permute.xlu0 %1733
    %v1736 = vmul.f32 %v1732, %v1734
    %1738 = vrot.lane.b32.xlu0 %v1736, 127
    %v1739 = vpop.permute.xlu0 %1738
    %v1741 = vadd.f32 %v1728, %v1739
    %1743 = vset.pattern.permute.xlu0 0
    %1744 = vperm.xlu0 %1743, %v1741
    %v1745 = vpop.permute.xlu0 %1744
    %v1747 = vmul.f32 %v1745, %v412
    %1748 = vmatprep.subr.mxu0 0.0
    %1749 = vmatpush1.msra.mxu0 %v414
    %1750 = vmatprep.subr.mxu0 0.0
    %1751 = vmatpush1.msra.mxu0 %v415
    %1752 = vmatprep.subr.mxu0 0.0
    %1753 = vmatpush1.msra.mxu0 %v416
    %1754 = vmatprep.subr.mxu0 0.0
    %1755 = vmatpush1.msra.mxu0 %v417
    %1756 = vmatprep.subr.mxu0 0.0
    %1757 = vmatpush1.msra.mxu0 0.0
    %1758 = vmatprep.subr.mxu0 0.0
    %1759 = vmatpush1.msra.mxu0 0.0
    %1760 = vmatprep.subr.mxu0 0.0
    %1761 = vmatpush1.msra.mxu0 0.0
    %1762 = vmatprep.subr.mxu0 0.0
    %1763 = vmatpush1.msra.mxu0 0.0
    %1764 = vmatprep.subr.mxu0 0.0
    %1765 = vmatpush1.msra.mxu0 0.0
    %1766 = vmatprep.subr.mxu0 0.0
    %1767 = vmatpush1.msra.mxu0 0.0
    %1768 = vmatprep.subr.mxu0 0.0
    %1769 = vmatpush1.msra.mxu0 0.0
    %1770 = vmatprep.subr.mxu0 0.0
    %1771 = vmatpush1.msra.mxu0 0.0
    %1772 = vmatprep.subr.mxu0 0.0
    %1773 = vmatpush1.msra.mxu0 0.0
    %1774 = vmatprep.subr.mxu0 0.0
    %1775 = vmatpush1.msra.mxu0 0.0
    %1776 = vmatprep.subr.mxu0 0.0
    %1777 = vmatpush1.msra.mxu0 0.0
    %1778 = vmatprep.subr.mxu0 0.0
    %1779 = vmatpush1.msra.mxu0 0.0
    %1780 = vmatprep.subr.mxu0 0.0
    %1781 = vmatpush1.msra.mxu0 0.0
    %1782 = vmatprep.subr.mxu0 0.0
    %1783 = vmatpush1.msra.mxu0 0.0
    %1784 = vmatprep.subr.mxu0 0.0
    %1785 = vmatpush1.msra.mxu0 0.0
    %1786 = vmatprep.subr.mxu0 0.0
    %1787 = vmatpush1.msra.mxu0 0.0
    %1788 = vmatprep.subr.mxu0 0.0
    %1789 = vmatpush1.msra.mxu0 0.0
    %1790 = vmatprep.subr.mxu0 0.0
    %1791 = vmatpush1.msra.mxu0 0.0
    %1792 = vmatprep.subr.mxu0 0.0
    %1793 = vmatpush1.msra.mxu0 0.0
    %1794 = vmatprep.subr.mxu0 0.0
    %1795 = vmatpush1.msra.mxu0 0.0
    %1796 = vmatprep.subr.mxu0 0.0
    %1797 = vmatpush1.msra.mxu0 0.0
    %1798 = vmatprep.subr.mxu0 0.0
    %1799 = vmatpush1.msra.mxu0 0.0
    %1800 = vmatprep.subr.mxu0 0.0
    %1801 = vmatpush1.msra.mxu0 0.0
    %1802 = vmatprep.subr.mxu0 0.0
    %1803 = vmatpush1.msra.mxu0 0.0
    %1804 = vmatprep.subr.mxu0 0.0
    %1805 = vmatpush1.msra.mxu0 0.0
    %1806 = vmatprep.subr.mxu0 0.0
    %1807 = vmatpush1.msra.mxu0 0.0
    %1808 = vmatprep.subr.mxu0 0.0
    %1809 = vmatpush1.msra.mxu0 0.0
    %1810 = vmatprep.subr.mxu0 0.0
    %1811 = vmatpush1.msra.mxu0 0.0
    %1812 = vmatprep.mubr.f32.mxu0 0.0
    %1813 = vmatmul.mubr.f32.gmra.mrb[0].mxu0 %v1659
    %v1814 = vpop.f32.mrb[0].mxu0
    %v1815 = vadd.f32 0.0, %v1814
    %v1816 = vpop.f32.mrb[0].mxu0
    %1817 = vdwg.mxu0
    %v1818 = vadd.f32 %v1747, %v1815
    %v1819 = vadd.f32 %v1818, %v404
    %v1820 = vxor.u32 %v1819, 2147483648
    %v1821 = vmul.f32 %v1820, 1.442695
    %v1822 = vpow.pop %v1821
    %v1823 = vadd.f32 %v1822, 1.0
    %v1824 = vrcp.pop %v1823
    %v1825 = vmul.f32 1.0, %v1824
    %v1826 = vtanh.pop %v1819
    %v1827 = vmul.f32 %v1825, %v1649
    %1829 = vrot.lane.b32.xlu0 %v1826, 64
    %v1830 = vpop.permute.xlu0 %1829
    %v1832 = vmul.f32 %v1825, %v1830
    %1834 = vrot.lane.b32.xlu0 %v1832, 32
    %v1835 = vpop.permute.xlu0 %1834
    %v1837 = vadd.f32 %v1827, %v1835
    %v1838 = vtanh.pop %v1837
    %1840 = vrot.lane.b32.xlu0 %v1838, 64
    %v1841 = vpop.permute.xlu0 %1840
    %v1843 = vmul.f32 %v1825, %v1841
    %1845 = vrot.lane.b32.xlu0 %v1843, 32
    %v1846 = vpop.permute.xlu0 %1845
    %v1847 = vsel %vm248, %v1846, 0
    %1849 = vmatprep.subr.mxu0 0.0
    %1850 = vmatpush1.msra.mxu0 %v418
    %1851 = vmatprep.subr.mxu0 0.0
    %1852 = vmatpush1.msra.mxu0 %v419
    %1853 = vmatprep.subr.mxu0 0.0
    %1854 = vmatpush1.msra.mxu0 %v420
    %1855 = vmatprep.subr.mxu0 0.0
    %1856 = vmatpush1.msra.mxu0 %v421
    %1857 = vmatprep.subr.mxu0 0.0
    %1858 = vmatpush1.msra.mxu0 0.0
    %1859 = vmatprep.subr.mxu0 0.0
    %1860 = vmatpush1.msra.mxu0 0.0
    %1861 = vmatprep.subr.mxu0 0.0
    %1862 = vmatpush1.msra.mxu0 0.0
    %1863 = vmatprep.subr.mxu0 0.0
    %1864 = vmatpush1.msra.mxu0 0.0
    %1865 = vmatprep.subr.mxu0 0.0
    %1866 = vmatpush1.msra.mxu0 0.0
    %1867 = vmatprep.subr.mxu0 0.0
    %1868 = vmatpush1.msra.mxu0 0.0
    %1869 = vmatprep.subr.mxu0 0.0
    %1870 = vmatpush1.msra.mxu0 0.0
    %1871 = vmatprep.subr.mxu0 0.0
    %1872 = vmatpush1.msra.mxu0 0.0
    %1873 = vmatprep.subr.mxu0 0.0
    %1874 = vmatpush1.msra.mxu0 0.0
    %1875 = vmatprep.subr.mxu0 0.0
    %1876 = vmatpush1.msra.mxu0 0.0
    %1877 = vmatprep.subr.mxu0 0.0
    %1878 = vmatpush1.msra.mxu0 0.0
    %1879 = vmatprep.subr.mxu0 0.0
    %1880 = vmatpush1.msra.mxu0 0.0
    %1881 = vmatprep.subr.mxu0 0.0
    %1882 = vmatpush1.msra.mxu0 0.0
    %1883 = vmatprep.subr.mxu0 0.0
    %1884 = vmatpush1.msra.mxu0 0.0
    %1885 = vmatprep.subr.mxu0 0.0
    %1886 = vmatpush1.msra.mxu0 0.0
    %1887 = vmatprep.subr.mxu0 0.0
    %1888 = vmatpush1.msra.mxu0 0.0
    %1889 = vmatprep.subr.mxu0 0.0
    %1890 = vmatpush1.msra.mxu0 0.0
    %1891 = vmatprep.subr.mxu0 0.0
    %1892 = vmatpush1.msra.mxu0 0.0
    %1893 = vmatprep.subr.mxu0 0.0
    %1894 = vmatpush1.msra.mxu0 0.0
    %1895 = vmatprep.subr.mxu0 0.0
    %1896 = vmatpush1.msra.mxu0 0.0
    %1897 = vmatprep.subr.mxu0 0.0
    %1898 = vmatpush1.msra.mxu0 0.0
    %1899 = vmatprep.subr.mxu0 0.0
    %1900 = vmatpush1.msra.mxu0 0.0
    %1901 = vmatprep.subr.mxu0 0.0
    %1902 = vmatpush1.msra.mxu0 0.0
    %1903 = vmatprep.subr.mxu0 0.0
    %1904 = vmatpush1.msra.mxu0 0.0
    %1905 = vmatprep.subr.mxu0 0.0
    %1906 = vmatpush1.msra.mxu0 0.0
    %1907 = vmatprep.subr.mxu0 0.0
    %1908 = vmatpush1.msra.mxu0 0.0
    %1909 = vmatprep.subr.mxu0 0.0
    %1910 = vmatpush1.msra.mxu0 0.0
    %1911 = vmatprep.subr.mxu0 0.0
    %1912 = vmatpush1.msra.mxu0 0.0
    %1913 = vmatprep.mubr.f32.mxu0 0.0
    %1914 = vmatmul.mubr.f32.gmra.mrb[0].mxu0 %v1847
    %v1915 = vpop.f32.mrb[0].mxu0
    %v1916 = vadd.f32 %v528, %v1915
    %v1917 = vpop.f32.mrb[0].mxu0
    %1918 = vdwg.mxu0
    %v1919 = vmul.f32 %v1916, 1.442695
    %v1920 = vpow.pop %v1919
    %1921 = vrot.lane.b32.xlu0 %v423, 122
    %v1922 = vpop.permute.xlu0 %1921
    %v1924 = vmul.f32 %v1920, %v1922
    %1926 = vrot.lane.b32.xlu0 %v1924, 127
    %v1927 = vpop.permute.xlu0 %1926
    %v1929 = vadd.f32 %v1916, %v1927
    %1931 = vrot.lane.b32.xlu0 %v791, 1
    %v1932 = vpop.permute.xlu0 %1931
    %1935 = vrot.lane.b32.xlu0 %v976, 2
    %v1936 = vpop.permute.xlu0 %1935
    %1939 = vrot.lane.b32.xlu0 %v1164, 3
    %v1940 = vpop.permute.xlu0 %1939
    %1943 = vrot.lane.b32.xlu0 %v1352, 4
    %v1944 = vpop.permute.xlu0 %1943
    %1947 = vrot.lane.b32.xlu0 %v1540, 5
    %v1948 = vpop.permute.xlu0 %1947
    %1951 = vrot.lane.b32.xlu0 %v1728, 6
    %v1952 = vpop.permute.xlu0 %1951
    %1955 = vrot.lane.b32.xlu0 %v1916, 7
    %v1956 = vpop.permute.xlu0 %1955
    %vm1958 = vcmask 7168
    %v1959 = vsel %vm1958, %v602, %v1932
    %vm1960 = vcmask 15360
    %v1961 = vsel %vm1960, %v1959, %v1936
    %vm1962 = vcmask 23552
    %v1963 = vsel %vm1962, %v1961, %v1940
    %vm1964 = vcmask 31744
    %v1965 = vsel %vm1964, %v1963, %v1944
    %vm1966 = vcmask 39936
    %v1967 = vsel %vm1966, %v1965, %v1948
    %vm1968 = vcmask 48128
    %v1969 = vsel %vm1968, %v1967, %v1952
    %vm1970 = vcmask 56320
    %v1971 = vsel %vm1970, %v1969, %v1956
    %1973 = vrot.lane.b32.xlu0 %v602, 127
    %v1974 = vpop.permute.xlu0 %1973
    %1976 = vrot.lane.b32.xlu0 %v976, 1
    %v1977 = vpop.permute.xlu0 %1976
    %1979 = vrot.lane.b32.xlu0 %v1164, 2
    %v1980 = vpop.permute.xlu0 %1979
    %1982 = vrot.lane.b32.xlu0 %v1352, 3
    %v1983 = vpop.permute.xlu0 %1982
    %1985 = vrot.lane.b32.xlu0 %v1540, 4
    %v1986 = vpop.permute.xlu0 %1985
    %1988 = vrot.lane.b32.xlu0 %v1728, 5
    %v1989 = vpop.permute.xlu0 %1988
    %1991 = vrot.lane.b32.xlu0 %v1916, 6
    %v1992 = vpop.permute.xlu0 %1991
    %v1994 = vsel %vm1958, %v1974, %v791
    %v1995 = vsel %vm1960, %v1994, %v1977
    %v1996 = vsel %vm1962, %v1995, %v1980
    %v1997 = vsel %vm1964, %v1996, %v1983
    %v1998 = vsel %vm1966, %v1997, %v1986
    %v1999 = vsel %vm1968, %v1998, %v1989
    %v2000 = vsel %vm1970, %v1999, %v1992
    %2001 = vrot.lane.b32.xlu0 %v801, 1
    %v2002 = vpop.permute.xlu0 %2001
    %2004 = vrot.lane.b32.xlu0 %v989, 2
    %v2005 = vpop.permute.xlu0 %2004
    %2007 = vrot.lane.b32.xlu0 %v1177, 3
    %v2008 = vpop.permute.xlu0 %2007
    %2010 = vrot.lane.b32.xlu0 %v1365, 4
    %v2011 = vpop.permute.xlu0 %2010
    %2013 = vrot.lane.b32.xlu0 %v1553, 5
    %v2014 = vpop.permute.xlu0 %2013
    %2016 = vrot.lane.b32.xlu0 %v1741, 6
    %v2017 = vpop.permute.xlu0 %2016
    %2020 = vrot.lane.b32.xlu0 %v1929, 7
    %v2021 = vpop.permute.xlu0 %2020
    %v2023 = vsel %vm1958, %v616, %v2002
    %v2024 = vsel %vm1960, %v2023, %v2005
    %v2025 = vsel %vm1962, %v2024, %v2008
    %v2026 = vsel %vm1964, %v2025, %v2011
    %v2027 = vsel %vm1966, %v2026, %v2014
    %v2028 = vsel %vm1968, %v2027, %v2017
    %v2029 = vsel %vm1970, %v2028, %v2021
    %v2030 = vld [vmem:[#allocation11] sm:$0xff]
    %v2031 = vld [vmem:[#allocation13] sm:$0x1]
    %v2033 = vlaneseq
    %v2034 = vshrl.u32 %v2033, 7
    %v2035 = vsub.s32 0, %v2034
    %v2036 = vrot.slane %v2031, %v2035
    %v2039 = vsel %vm162, %v2029, 0
    %2041 = vmatprep.subr.mxu0 0.0
    %2042 = vmatpush1.msra.mxu0 %v2030
    %2043 = vmatprep.subr.mxu0 0.0
    %2044 = vmatpush1.msra.mxu0 0.0
    %2045 = vmatprep.subr.mxu0 0.0
    %2046 = vmatpush1.msra.mxu0 0.0
    %2047 = vmatprep.subr.mxu0 0.0
    %2048 = vmatpush1.msra.mxu0 0.0
    %2049 = vmatprep.subr.mxu0 0.0
    %2050 = vmatpush1.msra.mxu0 0.0
    %2051 = vmatprep.subr.mxu0 0.0
    %2052 = vmatpush1.msra.mxu0 0.0
    %2053 = vmatprep.subr.mxu0 0.0
    %2054 = vmatpush1.msra.mxu0 0.0
    %2055 = vmatprep.subr.mxu0 0.0
    %2056 = vmatpush1.msra.mxu0 0.0
    %2057 = vmatprep.subr.mxu0 0.0
    %2058 = vmatpush1.msra.mxu0 0.0
    %2059 = vmatprep.subr.mxu0 0.0
    %2060 = vmatpush1.msra.mxu0 0.0
    %2061 = vmatprep.subr.mxu0 0.0
    %2062 = vmatpush1.msra.mxu0 0.0
    %2063 = vmatprep.subr.mxu0 0.0
    %2064 = vmatpush1.msra.mxu0 0.0
    %2065 = vmatprep.subr.mxu0 0.0
    %2066 = vmatpush1.msra.mxu0 0.0
    %2067 = vmatprep.subr.mxu0 0.0
    %2068 = vmatpush1.msra.mxu0 0.0
    %2069 = vmatprep.subr.mxu0 0.0
    %2070 = vmatpush1.msra.mxu0 0.0
    %2071 = vmatprep.subr.mxu0 0.0
    %2072 = vmatpush1.msra.mxu0 0.0
    %2073 = vmatprep.subr.mxu0 0.0
    %2074 = vmatpush1.msra.mxu0 0.0
    %2075 = vmatprep.subr.mxu0 0.0
    %2076 = vmatpush1.msra.mxu0 0.0
    %2077 = vmatprep.subr.mxu0 0.0
    %2078 = vmatpush1.msra.mxu0 0.0
    %2079 = vmatprep.subr.mxu0 0.0
    %2080 = vmatpush1.msra.mxu0 0.0
    %2081 = vmatprep.subr.mxu0 0.0
    %2082 = vmatpush1.msra.mxu0 0.0
    %2083 = vmatprep.subr.mxu0 0.0
    %2084 = vmatpush1.msra.mxu0 0.0
    %2085 = vmatprep.subr.mxu0 0.0
    %2086 = vmatpush1.msra.mxu0 0.0
    %2087 = vmatprep.subr.mxu0 0.0
    %2088 = vmatpush1.msra.mxu0 0.0
    %2089 = vmatprep.subr.mxu0 0.0
    %2090 = vmatpush1.msra.mxu0 0.0
    %2091 = vmatprep.subr.mxu0 0.0
    %2092 = vmatpush1.msra.mxu0 0.0
    %2093 = vmatprep.subr.mxu0 0.0
    %2094 = vmatpush1.msra.mxu0 0.0
    %2095 = vmatprep.subr.mxu0 0.0
    %2096 = vmatpush1.msra.mxu0 0.0
    %2097 = vmatprep.subr.mxu0 0.0
    %2098 = vmatpush1.msra.mxu0 0.0
    %2099 = vmatprep.subr.mxu0 0.0
    %2100 = vmatpush1.msra.mxu0 0.0
    %2101 = vmatprep.subr.mxu0 0.0
    %2102 = vmatpush1.msra.mxu0 0.0
    %2103 = vmatprep.subr.mxu0 0.0
    %2104 = vmatpush1.msra.mxu0 0.0
    %2105 = vmatprep.mubr.f32.mxu0 0.0
    %2106 = vmatmul.mubr.f32.gmra.mrb[0].mxu0 %v2039
    %v2107 = vpop.f32.mrb[0].mxu0
    %v2108 = vadd.f32 %v2036, %v2107
    %v2109 = vpop.f32.mrb[0].mxu0
    %2110 = vdwg.mxu0
    %v2111 = vtanh.pop %v2108
    %v2112 = vld [vmem:[%s14] sm:$0xff]
    %v2113 = vld [vmem:[%s14 + $0x8] sm:$0xff]
    %v2114 = vld [vmem:[%s14 + $0x10] sm:$0xff]
    %v2115 = vld [vmem:[%s14 + $0x18] sm:$0xff]
    %v2116 = vld [vmem:[#allocation14] sm:$0x1]
    %v2118 = vlaneseq
    %v2119 = vshrl.u32 %v2118, 7
    %v2120 = vsub.s32 0, %v2119
    %v2121 = vrot.slane %v2116, %v2120
    %v2124 = vsel %vm248, %v2111, 0
    %2126 = vmatprep.subr.mxu0 0.0
    %2127 = vmatpush1.msra.mxu0 %v2112
    %2128 = vmatprep.subr.mxu0 0.0
    %2129 = vmatpush1.msra.mxu0 %v2113
    %2130 = vmatprep.subr.mxu0 0.0
    %2131 = vmatpush1.msra.mxu0 %v2114
    %2132 = vmatprep.subr.mxu0 0.0
    %2133 = vmatpush1.msra.mxu0 %v2115
    %2134 = vmatprep.subr.mxu0 0.0
    %2135 = vmatpush1.msra.mxu0 0.0
    %2136 = vmatprep.subr.mxu0 0.0
    %2137 = vmatpush1.msra.mxu0 0.0
    %2138 = vmatprep.subr.mxu0 0.0
    %2139 = vmatpush1.msra.mxu0 0.0
    %2140 = vmatprep.subr.mxu0 0.0
    %2141 = vmatpush1.msra.mxu0 0.0
    %2142 = vmatprep.subr.mxu0 0.0
    %2143 = vmatpush1.msra.mxu0 0.0
    %2144 = vmatprep.subr.mxu0 0.0
    %2145 = vmatpush1.msra.mxu0 0.0
    %2146 = vmatprep.subr.mxu0 0.0
    %2147 = vmatpush1.msra.mxu0 0.0
    %2148 = vmatprep.subr.mxu0 0.0
    %2149 = vmatpush1.msra.mxu0 0.0
    %2150 = vmatprep.subr.mxu0 0.0
    %2151 = vmatpush1.msra.mxu0 0.0
    %2152 = vmatprep.subr.mxu0 0.0
    %2153 = vmatpush1.msra.mxu0 0.0
    %2154 = vmatprep.subr.mxu0 0.0
    %2155 = vmatpush1.msra.mxu0 0.0
    %2156 = vmatprep.subr.mxu0 0.0
    %2157 = vmatpush1.msra.mxu0 0.0
    %2158 = vmatprep.subr.mxu0 0.0
    %2159 = vmatpush1.msra.mxu0 0.0
    %2160 = vmatprep.subr.mxu0 0.0
    %2161 = vmatpush1.msra.mxu0 0.0
    %2162 = vmatprep.subr.mxu0 0.0
    %2163 = vmatpush1.msra.mxu0 0.0
    %2164 = vmatprep.subr.mxu0 0.0
    %2165 = vmatpush1.msra.mxu0 0.0
    %2166 = vmatprep.subr.mxu0 0.0
    %2167 = vmatpush1.msra.mxu0 0.0
    %2168 = vmatprep.subr.mxu0 0.0
    %2169 = vmatpush1.msra.mxu0 0.0
    %2170 = vmatprep.subr.mxu0 0.0
    %2171 = vmatpush1.msra.mxu0 0.0
    %2172 = vmatprep.subr.mxu0 0.0
    %2173 = vmatpush1.msra.mxu0 0.0
    %2174 = vmatprep.subr.mxu0 0.0
    %2175 = vmatpush1.msra.mxu0 0.0
    %2176 = vmatprep.subr.mxu0 0.0
    %2177 = vmatpush1.msra.mxu0 0.0
    %2178 = vmatprep.subr.mxu0 0.0
    %2179 = vmatpush1.msra.mxu0 0.0
    %2180 = vmatprep.subr.mxu0 0.0
    %2181 = vmatpush1.msra.mxu0 0.0
    %2182 = vmatprep.subr.mxu0 0.0
    %2183 = vmatpush1.msra.mxu0 0.0
    %2184 = vmatprep.subr.mxu0 0.0
    %2185 = vmatpush1.msra.mxu0 0.0
    %2186 = vmatprep.subr.mxu0 0.0
    %2187 = vmatpush1.msra.mxu0 0.0
    %2188 = vmatprep.subr.mxu0 0.0
    %2189 = vmatpush1.msra.mxu0 0.0
    %2190 = vmatprep.mubr.f32.mxu0 0.0
    %2191 = vmatmul.mubr.f32.gmra.mrb[0].mxu0 %v2124
    %v2192 = vpop.f32.mrb[0].mxu0
    %v2193 = vadd.f32 %v2121, %v2192
    %v2194 = vpop.f32.mrb[0].mxu0
    %2195 = vdwg.mxu0
    %2196 = vst.msk [vmem:[#allocation16] sm:$0xff] %vm162, %v1971
    %2197 = vst.msk [vmem:[#allocation17] sm:$0xff] %vm162, %v2000
    %2198 = vst.msk [vmem:[#allocation19] sm:$0xff] %vm162, %v2029
    %2199 = vst.msk [vmem:[#allocation20] sm:$0xff] %vm162, %v2193
    // Predicated region
    $region98: #{vae_forward.1} parent=1 // pred_check
      _
    $region99: #{vae_forward.1} parent=1 // pred_check_branch
      %2201 = sbr.rel (0) target = $region101
    $region100: #{vae_forward.1} parent=1 // pred_region
      %s2203 = ssub.s32 128, 128
      %2204 = vsyncadd [#allocation4], %s2203
      %s2206 = sshll.u32 [#allocation16], 4
      %s2207 = int_to_ptr.vmem [resolvable:$true] %s2206
      %2209 = dma.vmem_to_hbm [thread:$0]  %s2207, 128, %s16, [#allocation4]
    $region101: #{vae_forward.1} parent=1 // pred_fallthru
      _
    // Predicated region
    $region102: #{vae_forward.1} parent=1 // pred_check
      _
    $region103: #{vae_forward.1} parent=1 // pred_check_branch
      %2211 = sbr.rel (0) target = $region105
    $region104: #{vae_forward.1} parent=1 // pred_region
      %s2213 = ssub.s32 128, 128
      %2214 = vsyncadd [#allocation18], %s2213
      %s2216 = sshll.u32 [#allocation17], 4
      %s2217 = int_to_ptr.vmem [resolvable:$true] %s2216
      %2219 = dma.vmem_to_hbm [thread:$0]  %s2217, 128, %s17, [#allocation18]
    $region105: #{vae_forward.1} parent=1 // pred_fallthru
      _
    // Predicated region
    $region106: #{vae_forward.1} parent=1 // pred_check
      _
    $region107: #{vae_forward.1} parent=1 // pred_check_branch
      %2221 = sbr.rel (0) target = $region109
    $region108: #{vae_forward.1} parent=1 // pred_region
      %s2223 = ssub.s32 128, 128
      %2224 = vsyncadd [#allocation18], %s2223
      %s2226 = sshll.u32 [#allocation19], 4
      %s2227 = int_to_ptr.vmem [resolvable:$true] %s2226
      %2229 = dma.vmem_to_hbm [thread:$0]  %s2227, 128, %s18, [#allocation18]
    $region109: #{vae_forward.1} parent=1 // pred_fallthru
      _
    // Predicated region
    $region110: #{vae_forward.1} parent=1 // pred_check
      _
    $region111: #{vae_forward.1} parent=1 // pred_check_branch
      %2231 = sbr.rel (0) target = $region113
    $region112: #{vae_forward.1} parent=1 // pred_region
      %s2233 = ssub.s32 128, 128
      %2234 = vsyncadd [#allocation21], %s2233
      %s2236 = sshll.u32 [#allocation20], 4
      %s2237 = int_to_ptr.vmem [resolvable:$true] %s2236
      %2239 = dma.vmem_to_hbm [thread:$0]  %s2237, 128, %s19, [#allocation21]
    $region113: #{vae_forward.1} parent=1 // pred_fallthru
      _
    // Predicated region
    $region114: #{vae_forward.1} parent=1 // pred_check
      _
    $region115: #{vae_forward.1} parent=1 // pred_check_branch
      %2241 = sbr.rel (0) target = $region117
    $region116: #{vae_forward.1} parent=1 // pred_region
      %2242 = dma.done [#allocation4], 128
    $region117: #{vae_forward.1} parent=1 // pred_fallthru
      _
    // Predicated region
    $region118: #{vae_forward.1} parent=1 // pred_check
      _
    $region119: #{vae_forward.1} parent=1 // pred_check_branch
      %2244 = sbr.rel (0) target = $region121
    $region120: #{vae_forward.1} parent=1 // pred_region
      %2245 = dma.done [#allocation18], 128
    $region121: #{vae_forward.1} parent=1 // pred_fallthru
      _
    // Predicated region
    $region122: #{vae_forward.1} parent=1 // pred_check
      _
    $region123: #{vae_forward.1} parent=1 // pred_check_branch
      %2247 = sbr.rel (0) target = $region125
    $region124: #{vae_forward.1} parent=1 // pred_region
      %2248 = dma.done [#allocation18], 128
    $region125: #{vae_forward.1} parent=1 // pred_fallthru
      _
    // Predicated region
    $region126: #{vae_forward.1} parent=1 // pred_check
      _
    $region127: #{vae_forward.1} parent=1 // pred_check_branch
      %2250 = sbr.rel (0) target = $region129
    $region128: #{vae_forward.1} parent=1 // pred_region
      %2251 = dma.done [#allocation21], 128
    $region129: #{vae_forward.1} parent=1 // pred_fallthru
      _
    %2252 = vsyncpa [#allocation3], 1
    %2253 = vsyncpa [#allocation6], 1
    %2254 = vsyncpa [#allocation9], 1
    %2255 = vsyncpa [#allocation12], 1
    %2256 = vsyncpa [#allocation15], 1
    %2257 = vsyncpa [#allocation4], 1
    %2258 = vsyncpa [#allocation18], 1
    %2259 = vsyncpa [#allocation21], 1

</llo_original>
